<compile_context>
chip_gen: v7x
topology: tpu7x:2x2x1
jax: 0.10.0
libtpu: 0.0.40
codegen_flags: <defaults>
</compile_context>

<pallas_src>
import jax
import jax.numpy as jnp
from jax.experimental import pallas as pl
from jax.experimental.pallas import tpu as pltpu

N_CIRCS = 3     # number of rectangles
LANE = 128      # TPU lane width
TS = 256        # sublane rows per grid step -> TS*LANE = 32768 points / step


def multirect_sdf_kernel(params_ref, qx_ref, qy_ref, o_ref):
    """params_ref: flat SMEM (6*n_circs,) = [cos, sin, tx, ty, rx, ry] per shape.
    qx_ref/qy_ref/o_ref: (TS, 128) VMEM tiles."""
    n_circs = params_ref.shape[0] // 6

    qx = qx_ref[...]            # (TS, 128)
    qy = qy_ref[...]            # (TS, 128)

    result = None
    # n_circs is small & static -> unrolled Python loop over shapes.
    for i in range(n_circs):
        base = 6 * i
        c = params_ref[base + 0]   # cos(a)  (precomputed in wrapper)
        s = params_ref[base + 1]   # sin(a)
        tx = params_ref[base + 2]
        ty = params_ref[base + 3]
        rx = params_ref[base + 4]
        ry = params_ref[base + 5]

        # RotatedSDF: evaluate base sdf at R(-a) @ q
        x_l = c * qx + s * qy
        y_l = c * qy - s * qx

        # TranslatedSDF + RectSDF (half-extents rx, ry)
        dx = jnp.abs(x_l - tx) - rx
        dy = jnp.abs(y_l - ty) - ry
        mdx = jnp.maximum(dx, 0.0)
        mdy = jnp.maximum(dy, 0.0)
        outside = jnp.sqrt(mdx * mdx + mdy * mdy)
        inside = jnp.minimum(jnp.maximum(dx, dy), 0.0)
        d = outside + inside

        # nary_sharp_union == min over shapes
        result = d if result is None else jnp.minimum(result, d)

    o_ref[...] = result


def multirect_sdf(query, trans, rads, angles, *, ts=TS):
    """query: (2, N) f32; trans/rads: (n_circs, 2); angles: (n_circs, 1).
    Returns (N,) f32 = min rectangle SDF per query point."""
    two, n = query.shape
    assert two == 2

    tile_pts = ts * LANE
    n_pad = pl.cdiv(n, tile_pts) * tile_pts
    if n_pad != n:
        query = jnp.pad(query, ((0, 0), (0, n_pad - n)))
    m = n_pad // LANE

    # Sublane+lane-dense layouts: each DMA row is a contiguous TS*512 B chunk.
    qx = query[0].reshape(m, LANE)
    qy = query[1].reshape(m, LANE)

    # Hoist the loop/grid-invariant transcendentals out of the kernel and pack
    # all per-shape scalars into one flat SMEM array.
    a = angles[:, 0].astype(jnp.float32)
    params = jnp.stack(
        [jnp.cos(a), jnp.sin(a),
         trans[:, 0].astype(jnp.float32), trans[:, 1].astype(jnp.float32),
         rads[:, 0].astype(jnp.float32), rads[:, 1].astype(jnp.float32)],
        axis=1,
    ).reshape(-1)

    out = pl.pallas_call(
        multirect_sdf_kernel,
        out_shape=jax.ShapeDtypeStruct((m, LANE), jnp.float32),
        grid=(m // ts,),
        in_specs=[
            pl.BlockSpec(memory_space=pltpu.SMEM),          # packed shape params
            pl.BlockSpec((ts, LANE), lambda i: (i, 0)),     # qx tile
            pl.BlockSpec((ts, LANE), lambda i: (i, 0)),     # qy tile
        ],
        out_specs=pl.BlockSpec((ts, LANE), lambda i: (i, 0)),
        compiler_params=pltpu.CompilerParams(
            dimension_semantics=("parallel",)),
    )(params, qx, qy)

    return out.reshape(n_pad)[:n]


def multirect_sdf_ref(query, trans, rads, angles):
    """Pure-JAX reference of the same forward pass."""
    qx, qy = query[0], query[1]
    dists = []
    for i in range(trans.shape[0]):
        a = angles[i, 0]
        c, s = jnp.cos(a), jnp.sin(a)
        x_l = c * qx + s * qy
        y_l = c * qy - s * qx
        xp = x_l - trans[i, 0]
        yp = y_l - trans[i, 1]
        dx = jnp.abs(xp) - rads[i, 0]
        dy = jnp.abs(yp) - rads[i, 1]
        outside = jnp.sqrt(jnp.maximum(dx, 0.0) ** 2 + jnp.maximum(dy, 0.0) ** 2)
        inside = jnp.minimum(jnp.maximum(dx, dy), 0.0)
        dists.append(outside + inside)
    return jnp.min(jnp.stack(dists), axis=0)


if __name__ == "__main__":
    key = jax.random.PRNGKey(0)
    k_t, k_r, k_a, k_q = jax.random.split(key, 4)

    # Deterministic parameter init mirroring the PyTorch __init__:
    #   tparams = 0.5 - rand(2);  rads = 0.1 * rand(2);  angles = 0.1 * rand(1)
    trans = 0.5 - jax.random.uniform(k_t, (N_CIRCS, 2), dtype=jnp.float32)
    rads = 0.1 * jax.random.uniform(k_r, (N_CIRCS, 2), dtype=jnp.float32)
    angles = 0.1 * jax.random.uniform(k_a, (N_CIRCS, 1), dtype=jnp.float32)

    # Query points: (2, N). N chosen so the (padded) grid has 2 parallel steps
    # (exercises the padding path and shards across both v7x TensorCores).
    N = 60000
    query = jax.random.uniform(k_q, (2, N), dtype=jnp.float32, minval=-1.0, maxval=1.0)

    out = multirect_sdf(query, trans, rads, angles)
    out = jax.block_until_ready(out)

    ref = multirect_sdf_ref(query, trans, rads, angles)
    assert out.shape == (N,)
    assert jnp.allclose(out, ref, atol=1e-5, rtol=1e-5)

    print("KERNEL_OK")
</pallas_src>

<mosaic_0001>
module attributes {stable_mosaic.version = 11 : i64} {
  func.func @multirect_sdf_kernel(%arg0: i32, %arg1: memref<18xf32, #tpu.memory_space<smem>>, %arg2: memref<256x128xf32, #tpu.memory_space<vmem>>, %arg3: memref<256x128xf32, #tpu.memory_space<vmem>>, %arg4: memref<256x128xf32, #tpu.memory_space<vmem>>) attributes {dimension_semantics = [#tpu.dimension_semantics<parallel>], iteration_bounds = array<i64: 2>, scalar_prefetch = 0 : i64, scratch_operands = 0 : i64, tpu.core_type = #tpu.core_type<tc>, window_params = [{transform_indices = @transform_0, window_bounds = array<i64: 18>}, {transform_indices = @transform_1, window_bounds = array<i64: 256, 128>}, {transform_indices = @transform_2, window_bounds = array<i64: 256, 128>}, {transform_indices = @transform_3, window_bounds = array<i64: 256, 128>}]} {
    %c0 = arith.constant 0 : index
    %c0_0 = arith.constant 0 : index
    %0 = vector.load %arg2[%c0, %c0_0] : memref<256x128xf32, #tpu.memory_space<vmem>>, vector<256x128xf32>
    %c0_1 = arith.constant 0 : index
    %c0_2 = arith.constant 0 : index
    %1 = vector.load %arg3[%c0_1, %c0_2] : memref<256x128xf32, #tpu.memory_space<vmem>>, vector<256x128xf32>
    %c0_3 = arith.constant 0 : index
    %2 = memref.load %arg1[%c0_3] : memref<18xf32, #tpu.memory_space<smem>>
    %c1 = arith.constant 1 : index
    %3 = memref.load %arg1[%c1] : memref<18xf32, #tpu.memory_space<smem>>
    %c2 = arith.constant 2 : index
    %4 = memref.load %arg1[%c2] : memref<18xf32, #tpu.memory_space<smem>>
    %c3 = arith.constant 3 : index
    %5 = memref.load %arg1[%c3] : memref<18xf32, #tpu.memory_space<smem>>
    %c4 = arith.constant 4 : index
    %6 = memref.load %arg1[%c4] : memref<18xf32, #tpu.memory_space<smem>>
    %c5 = arith.constant 5 : index
    %7 = memref.load %arg1[%c5] : memref<18xf32, #tpu.memory_space<smem>>
    %8 = vector.broadcast %2 : f32 to vector<256x128xf32>
    %9 = arith.mulf %8, %0 : vector<256x128xf32>
    %10 = vector.broadcast %3 : f32 to vector<256x128xf32>
    %11 = arith.mulf %10, %1 : vector<256x128xf32>
    %12 = arith.addf %9, %11 : vector<256x128xf32>
    %13 = vector.broadcast %2 : f32 to vector<256x128xf32>
    %14 = arith.mulf %13, %1 : vector<256x128xf32>
    %15 = vector.broadcast %3 : f32 to vector<256x128xf32>
    %16 = arith.mulf %15, %0 : vector<256x128xf32>
    %17 = arith.subf %14, %16 : vector<256x128xf32>
    %18 = vector.broadcast %4 : f32 to vector<256x128xf32>
    %19 = arith.subf %12, %18 : vector<256x128xf32>
    %20 = math.absf %19 : vector<256x128xf32>
    %21 = vector.broadcast %6 : f32 to vector<256x128xf32>
    %22 = arith.subf %20, %21 : vector<256x128xf32>
    %23 = vector.broadcast %5 : f32 to vector<256x128xf32>
    %24 = arith.subf %17, %23 : vector<256x128xf32>
    %25 = math.absf %24 : vector<256x128xf32>
    %26 = vector.broadcast %7 : f32 to vector<256x128xf32>
    %27 = arith.subf %25, %26 : vector<256x128xf32>
    %cst = arith.constant 0.000000e+00 : f32
    %28 = vector.broadcast %cst : f32 to vector<256x128xf32>
    %29 = arith.maximumf %22, %28 : vector<256x128xf32>
    %cst_4 = arith.constant 0.000000e+00 : f32
    %30 = vector.broadcast %cst_4 : f32 to vector<256x128xf32>
    %31 = arith.maximumf %27, %30 : vector<256x128xf32>
    %32 = arith.mulf %29, %29 : vector<256x128xf32>
    %33 = arith.mulf %31, %31 : vector<256x128xf32>
    %34 = arith.addf %32, %33 : vector<256x128xf32>
    %35 = math.sqrt %34 : vector<256x128xf32>
    %36 = arith.maximumf %22, %27 : vector<256x128xf32>
    %cst_5 = arith.constant 0.000000e+00 : f32
    %37 = vector.broadcast %cst_5 : f32 to vector<256x128xf32>
    %38 = arith.minimumf %36, %37 : vector<256x128xf32>
    %39 = arith.addf %35, %38 : vector<256x128xf32>
    %c6 = arith.constant 6 : index
    %40 = memref.load %arg1[%c6] : memref<18xf32, #tpu.memory_space<smem>>
    %c7 = arith.constant 7 : index
    %41 = memref.load %arg1[%c7] : memref<18xf32, #tpu.memory_space<smem>>
    %c8 = arith.constant 8 : index
    %42 = memref.load %arg1[%c8] : memref<18xf32, #tpu.memory_space<smem>>
    %c9 = arith.constant 9 : index
    %43 = memref.load %arg1[%c9] : memref<18xf32, #tpu.memory_space<smem>>
    %c10 = arith.constant 10 : index
    %44 = memref.load %arg1[%c10] : memref<18xf32, #tpu.memory_space<smem>>
    %c11 = arith.constant 11 : index
    %45 = memref.load %arg1[%c11] : memref<18xf32, #tpu.memory_space<smem>>
    %46 = vector.broadcast %40 : f32 to vector<256x128xf32>
    %47 = arith.mulf %46, %0 : vector<256x128xf32>
    %48 = vector.broadcast %41 : f32 to vector<256x128xf32>
    %49 = arith.mulf %48, %1 : vector<256x128xf32>
    %50 = arith.addf %47, %49 : vector<256x128xf32>
    %51 = vector.broadcast %40 : f32 to vector<256x128xf32>
    %52 = arith.mulf %51, %1 : vector<256x128xf32>
    %53 = vector.broadcast %41 : f32 to vector<256x128xf32>
    %54 = arith.mulf %53, %0 : vector<256x128xf32>
    %55 = arith.subf %52, %54 : vector<256x128xf32>
    %56 = vector.broadcast %42 : f32 to vector<256x128xf32>
    %57 = arith.subf %50, %56 : vector<256x128xf32>
    %58 = math.absf %57 : vector<256x128xf32>
    %59 = vector.broadcast %44 : f32 to vector<256x128xf32>
    %60 = arith.subf %58, %59 : vector<256x128xf32>
    %61 = vector.broadcast %43 : f32 to vector<256x128xf32>
    %62 = arith.subf %55, %61 : vector<256x128xf32>
    %63 = math.absf %62 : vector<256x128xf32>
    %64 = vector.broadcast %45 : f32 to vector<256x128xf32>
    %65 = arith.subf %63, %64 : vector<256x128xf32>
    %cst_6 = arith.constant 0.000000e+00 : f32
    %66 = vector.broadcast %cst_6 : f32 to vector<256x128xf32>
    %67 = arith.maximumf %60, %66 : vector<256x128xf32>
    %cst_7 = arith.constant 0.000000e+00 : f32
    %68 = vector.broadcast %cst_7 : f32 to vector<256x128xf32>
    %69 = arith.maximumf %65, %68 : vector<256x128xf32>
    %70 = arith.mulf %67, %67 : vector<256x128xf32>
    %71 = arith.mulf %69, %69 : vector<256x128xf32>
    %72 = arith.addf %70, %71 : vector<256x128xf32>
    %73 = math.sqrt %72 : vector<256x128xf32>
    %74 = arith.maximumf %60, %65 : vector<256x128xf32>
    %cst_8 = arith.constant 0.000000e+00 : f32
    %75 = vector.broadcast %cst_8 : f32 to vector<256x128xf32>
    %76 = arith.minimumf %74, %75 : vector<256x128xf32>
    %77 = arith.addf %73, %76 : vector<256x128xf32>
    %78 = arith.minimumf %39, %77 : vector<256x128xf32>
    %c12 = arith.constant 12 : index
    %79 = memref.load %arg1[%c12] : memref<18xf32, #tpu.memory_space<smem>>
    %c13 = arith.constant 13 : index
    %80 = memref.load %arg1[%c13] : memref<18xf32, #tpu.memory_space<smem>>
    %c14 = arith.constant 14 : index
    %81 = memref.load %arg1[%c14] : memref<18xf32, #tpu.memory_space<smem>>
    %c15 = arith.constant 15 : index
    %82 = memref.load %arg1[%c15] : memref<18xf32, #tpu.memory_space<smem>>
    %c16 = arith.constant 16 : index
    %83 = memref.load %arg1[%c16] : memref<18xf32, #tpu.memory_space<smem>>
    %c17 = arith.constant 17 : index
    %84 = memref.load %arg1[%c17] : memref<18xf32, #tpu.memory_space<smem>>
    %85 = vector.broadcast %79 : f32 to vector<256x128xf32>
    %86 = arith.mulf %85, %0 : vector<256x128xf32>
    %87 = vector.broadcast %80 : f32 to vector<256x128xf32>
    %88 = arith.mulf %87, %1 : vector<256x128xf32>
    %89 = arith.addf %86, %88 : vector<256x128xf32>
    %90 = vector.broadcast %79 : f32 to vector<256x128xf32>
    %91 = arith.mulf %90, %1 : vector<256x128xf32>
    %92 = vector.broadcast %80 : f32 to vector<256x128xf32>
    %93 = arith.mulf %92, %0 : vector<256x128xf32>
    %94 = arith.subf %91, %93 : vector<256x128xf32>
    %95 = vector.broadcast %81 : f32 to vector<256x128xf32>
    %96 = arith.subf %89, %95 : vector<256x128xf32>
    %97 = math.absf %96 : vector<256x128xf32>
    %98 = vector.broadcast %83 : f32 to vector<256x128xf32>
    %99 = arith.subf %97, %98 : vector<256x128xf32>
    %100 = vector.broadcast %82 : f32 to vector<256x128xf32>
    %101 = arith.subf %94, %100 : vector<256x128xf32>
    %102 = math.absf %101 : vector<256x128xf32>
    %103 = vector.broadcast %84 : f32 to vector<256x128xf32>
    %104 = arith.subf %102, %103 : vector<256x128xf32>
    %cst_9 = arith.constant 0.000000e+00 : f32
    %105 = vector.broadcast %cst_9 : f32 to vector<256x128xf32>
    %106 = arith.maximumf %99, %105 : vector<256x128xf32>
    %cst_10 = arith.constant 0.000000e+00 : f32
    %107 = vector.broadcast %cst_10 : f32 to vector<256x128xf32>
    %108 = arith.maximumf %104, %107 : vector<256x128xf32>
    %109 = arith.mulf %106, %106 : vector<256x128xf32>
    %110 = arith.mulf %108, %108 : vector<256x128xf32>
    %111 = arith.addf %109, %110 : vector<256x128xf32>
    %112 = math.sqrt %111 : vector<256x128xf32>
    %113 = arith.maximumf %99, %104 : vector<256x128xf32>
    %cst_11 = arith.constant 0.000000e+00 : f32
    %114 = vector.broadcast %cst_11 : f32 to vector<256x128xf32>
    %115 = arith.minimumf %113, %114 : vector<256x128xf32>
    %116 = arith.addf %112, %115 : vector<256x128xf32>
    %117 = arith.minimumf %78, %116 : vector<256x128xf32>
    %c0_12 = arith.constant 0 : index
    %c0_13 = arith.constant 0 : index
    %118 = vector.load %arg4[%c0_12, %c0_13] : memref<256x128xf32, #tpu.memory_space<vmem>>, vector<256x128xf32>
    tpu.vector_store %arg4[%c0_12, %c0_13], %117 {strides = array<i32>} : memref<256x128xf32, #tpu.memory_space<vmem>>, vector<256x128xf32>,
    return
  }
  func.func @transform_0(%arg0: i32) -> i32 {
    %c0_i32 = arith.constant 0 : i32
    %c0_i32_0 = arith.constant 0 : i32
    return %c0_i32 : i32
  }
  func.func @transform_1(%arg0: i32) -> (i32, i32) {
    %c0_i32 = arith.constant 0 : i32
    %c0_i32_0 = arith.constant 0 : i32
    return %arg0, %c0_i32 : i32, i32
  }
  func.func @transform_2(%arg0: i32) -> (i32, i32) {
    %c0_i32 = arith.constant 0 : i32
    %c0_i32_0 = arith.constant 0 : i32
    return %arg0, %c0_i32 : i32, i32
  }
  func.func @transform_3(%arg0: i32) -> (i32, i32) {
    %c0_i32 = arith.constant 0 : i32
    %c0_i32_0 = arith.constant 0 : i32
    return %arg0, %c0_i32 : i32, i32
  }
}

</mosaic_0001>

<llo_original>
// kernel: tpu_custom_call.1
$region0: #{tpu_custom_call.1}
  #allocation0 [shape = 'u32[]', space=smem, size = 0x4, offset = 0x4, fixed_abs, tag = 'smem constant byte address 0x4 - core index']
  #allocation1 [shape = 'u32[144,128]{1,0:T(1,128)}', space=vmem, size = 0x12000, scoped, tag = 'internal scratch']
  %s0 = inlined_call_operand.hbm [shape: f32[18], index: 0, kind: input, shape index: {}]
  %s1 = inlined_call_operand.hbm [shape: f32[512,128], index: 1, kind: input, shape index: {}]
  %s2 = inlined_call_operand.hbm [shape: f32[512,128], index: 2, kind: input, shape index: {}]
  %s3 = inlined_call_operand.hbm [shape: f32[512,128], index: 3, kind: output, shape index: {}]
  %s4 = sld [smem:[#allocation0]]
  $region57: #{tpu_custom_call.1} parent=0
    _
  %s6 = ssub.s32 1, %s4
  %s7 = scalar_select 0, %s6, %s4
  $region1: #{tpu_custom_call.1} parent=0
    #allocation2 [shape = 'u8[512]{0}', space=smem, size = 0x200, scoped, tag = 'input window, operand 0, single buffered']
    #allocation3 [shape = 's32[2]{0}', space=sflag, size = 0x8, scoped, tag = 'scoped memory for tpu_custom_call.1']
    #allocation4 [shape = 's32[2]{0}', space=sflag, size = 0x8, scoped, tag = 'scoped memory for tpu_custom_call.1']
    #allocation5 [shape = 's32[2]{0}', space=sflag, size = 0x8, scoped, tag = 'scoped memory for tpu_custom_call.1']
    #allocation6 [shape = 'u8[262144]{0}', space=vmem, size = 0x40000, scoped, tag = 'input window, operand 1']
    #allocation7 [shape = 'u8[262144]{0}', space=vmem, size = 0x40000, scoped, tag = 'input window, operand 2']
    #allocation8 [shape = 's32[2]{0}', space=sflag, size = 0x8, scoped, tag = 'scoped memory for tpu_custom_call.1']
    #allocation9 [shape = 'u8[262144]{0}', space=vmem, size = 0x40000, scoped, tag = 'output window, operand 0']
    %8 = vsyncpa [#allocation5], 0
    %9 = vsyncpa [#allocation3], 0
    %s10 = scalar_lea.sflag [#allocation3], 1
    %11 = vsyncpa %s10, 0
    %12 = vsyncpa [#allocation8], 0
    %s13 = scalar_lea.sflag [#allocation8], 1
    %14 = vsyncpa %s13, 0
    %15 = vsyncpa [#allocation4], 0
    %s16 = scalar_lea.sflag [#allocation4], 1
    %17 = vsyncpa %s16, 0
    loop: start=0, step=1, limit=4
    $region2: #{tpu_custom_call.1} parent=1 // loop_pre_header
      _
    $region3: #{tpu_custom_call.1} parent=1 // loop_header
      %s19 = sphi 0, %s23
      %p20 = scmp.ge.s32.totalorder %s19, 4
      %s27 = sphi 0, %s27
      %s29 = sphi 0, %s27
      %s30 = sphi 0, %s29
      %s44 = sphi 0, %s30
      %s50 = sphi 0, %s52
      %s53 = sphi 0, %s50
      %s54 = sphi 0, %s53
      %s70 = sphi 0, %s54
      %s76 = sphi 0, %s78
      %s79 = sphi 0, %s76
      %s80 = sphi 0, %s79
      %s96 = sphi 0, %s80
      %s102 = sphi 0, %s104
      %s105 = sphi 0, %s102
      %s106 = sphi 0, %s105
      %s122 = sphi 0, %s106
    $region4: #{tpu_custom_call.1} parent=1 // loop_header_branch
      %22 = sbr.rel (%p20) target = $region8
    $region5: #{tpu_custom_call.1} parent=1 // loop_body
      %s24 = ssub.s32 %s19, 1
      %s25 = ssub.s32 %s19, 2
      %s26 = sadd.s32 %s19, 1
      %s28 = sadd.s32 %s27, 1
      %p31 = scmp.eq.s32.totalorder %s19, 1
      %p32 = scmp.ne.s32.totalorder %s27, %s29
      %p33 = scmp.eq.s32.totalorder %s19, 0
      %p34 = por %p32, %p33
      %p35 = scmp.ne.s32.totalorder %s27, %s29
      %p36 = scmp.eq.s32.totalorder %s24, 1
      %p37 = por %p35, %p36
      %p38 = scmp.ne.s32.totalorder %s29, %s30
      %p39 = scmp.eq.s32.totalorder %s24, 0
      %p40 = por %p38, %p39
      %p41 = scmp.ne.s32.totalorder %s29, %s30
      %p42 = scmp.eq.s32.totalorder %s25, 1
      %p43 = por %p41, %p42
      %p45 = scmp.ne.s32.totalorder %s30, %s44
      %p46 = scmp.eq.s32.totalorder %s25, 0
      %p47 = por %p45, %p46
      %s48 = ssub.s32 %s19, %s26
      %p49 = scmp.eq.s32.totalorder %s48, 0
      %s51 = sadd.s32 %s50, 1
      %s52 = scalar_select %p49, %s50, %s51
      %p55 = pneg %p49
      %p56 = scmp.eq.s32.totalorder %s19, 1
      %p57 = por %p55, %p56
      %p58 = scmp.ne.s32.totalorder %s50, %s53
      %p59 = scmp.eq.s32.totalorder %s19, 0
      %p60 = por %p58, %p59
      %p61 = scmp.ne.s32.totalorder %s50, %s53
      %p62 = scmp.eq.s32.totalorder %s24, 1
      %p63 = por %p61, %p62
      %p64 = scmp.ne.s32.totalorder %s53, %s54
      %p65 = scmp.eq.s32.totalorder %s24, 0
      %p66 = por %p64, %p65
      %p67 = scmp.ne.s32.totalorder %s53, %s54
      %p68 = scmp.eq.s32.totalorder %s25, 1
      %p69 = por %p67, %p68
      %p71 = scmp.ne.s32.totalorder %s54, %s70
      %p72 = scmp.eq.s32.totalorder %s25, 0
      %p73 = por %p71, %p72
      %s74 = ssub.s32 %s19, %s26
      %p75 = scmp.eq.s32.totalorder %s74, 0
      %s77 = sadd.s32 %s76, 1
      %s78 = scalar_select %p75, %s76, %s77
      %p81 = pneg %p75
      %p82 = scmp.eq.s32.totalorder %s19, 1
      %p83 = por %p81, %p82
      %p84 = scmp.ne.s32.totalorder %s76, %s79
      %p85 = scmp.eq.s32.totalorder %s19, 0
      %p86 = por %p84, %p85
      %p87 = scmp.ne.s32.totalorder %s76, %s79
      %p88 = scmp.eq.s32.totalorder %s24, 1
      %p89 = por %p87, %p88
      %p90 = scmp.ne.s32.totalorder %s79, %s80
      %p91 = scmp.eq.s32.totalorder %s24, 0
      %p92 = por %p90, %p91
      %p93 = scmp.ne.s32.totalorder %s79, %s80
      %p94 = scmp.eq.s32.totalorder %s25, 1
      %p95 = por %p93, %p94
      %p97 = scmp.ne.s32.totalorder %s80, %s96
      %p98 = scmp.eq.s32.totalorder %s25, 0
      %p99 = por %p97, %p98
      %s100 = ssub.s32 %s19, %s26
      %p101 = scmp.eq.s32.totalorder %s100, 0
      %s103 = sadd.s32 %s102, 1
      %s104 = scalar_select %p101, %s102, %s103
      %p107 = pneg %p101
      %p108 = scmp.eq.s32.totalorder %s19, 1
      %p109 = por %p107, %p108
      %p110 = scmp.ne.s32.totalorder %s102, %s105
      %p111 = scmp.eq.s32.totalorder %s19, 0
      %p112 = por %p110, %p111
      %p113 = scmp.ne.s32.totalorder %s102, %s105
      %p114 = scmp.eq.s32.totalorder %s24, 1
      %p115 = por %p113, %p114
      %p116 = scmp.ne.s32.totalorder %s105, %s106
      %p117 = scmp.eq.s32.totalorder %s24, 0
      %p118 = por %p116, %p117
      %p119 = scmp.ne.s32.totalorder %s105, %s106
      %p120 = scmp.eq.s32.totalorder %s25, 1
      %p121 = por %p119, %p120
      %p123 = scmp.ne.s32.totalorder %s106, %s122
      %p124 = scmp.eq.s32.totalorder %s25, 0
      %p125 = por %p123, %p124
      %p126 = scmp.le.s32.totalorder 1, %s19
      %p127 = scmp.lt.s32.totalorder %s19, 3
      %p128 = pnand %p126, %p127
      %p129 = pneg %p128
      // Predicated region
      $region9: #{tpu_custom_call.1} parent=5 // pred_check
        _
      $region10: #{tpu_custom_call.1} parent=5 // pred_check_branch
        %131 = sbr.rel (%p128) target = $region12
      $region11: #{tpu_custom_call.1} parent=5 // pred_region
        %s132 = ssub.s32 %s19, 1
        // Predicated region
        $region13: #{tpu_custom_call.1} parent=11 // pred_check
          %p133 = pneg %p40
        $region14: #{tpu_custom_call.1} parent=11 // pred_check_branch
          %135 = sbr.rel (%p133) target = $region16
        $region15: #{tpu_custom_call.1} parent=11 // pred_region
          %s137 = ssub.s32 16, 16
          %138 = vsyncadd [#allocation5], %s137
          %141 = dma.hbm_to_smem %s0, 16, [#allocation2], [#allocation5]
        $region16: #{tpu_custom_call.1} parent=11 // pred_fallthru
          _
      $region12: #{tpu_custom_call.1} parent=5 // pred_fallthru
        _
      %p142 = scmp.lt.s32.totalorder %s19, 2
      // Predicated region
      $region17: #{tpu_custom_call.1} parent=5 // pred_check
        %p143 = pneg %p142
      $region18: #{tpu_custom_call.1} parent=5 // pred_check_branch
        %145 = sbr.rel (%p143) target = $region20
      $region19: #{tpu_custom_call.1} parent=5 // pred_region
        // Predicated region
        $region21: #{tpu_custom_call.1} parent=19 // pred_check
          %p146 = pneg %p60
        $region22: #{tpu_custom_call.1} parent=19 // pred_check_branch
          %148 = sbr.rel (%p146) target = $region24
        $region23: #{tpu_custom_call.1} parent=19 // pred_region
          %s149 = sand.u32 %s50, 1
          %s150 = scalar_lea.sflag [#allocation3], %s149
          %s151 = sand.u32 %s50, 1
          %s152 = smul.addr %s151, 256
          %s153 = scalar_lea.vmem [#allocation6], %s152
          %s154 = smul.u32 32, %s19
          %s156 = ssub.s32 4096, 4096
          %157 = vsyncadd %s150, %s156
          %s158 = smul.addr %s154, 128
          %s159 = scalar_lea.hbm %s1, %s158
          %s160 = sshll.u32 %s153, 4
          %s161 = int_to_ptr.vmem [resolvable:$true] %s160
          %166 = dma.hbm_to_vmem [thread:$0]  %s159, 4096, %s161, %s150, 128, 128, 8
        $region24: #{tpu_custom_call.1} parent=19 // pred_fallthru
          _
        // Predicated region
        $region25: #{tpu_custom_call.1} parent=19 // pred_check
          %p167 = pneg %p86
        $region26: #{tpu_custom_call.1} parent=19 // pred_check_branch
          %169 = sbr.rel (%p167) target = $region28
        $region27: #{tpu_custom_call.1} parent=19 // pred_region
          %s170 = sand.u32 %s76, 1
          %s171 = scalar_lea.sflag [#allocation8], %s170
          %s172 = sand.u32 %s76, 1
          %s173 = smul.addr %s172, 256
          %s174 = scalar_lea.vmem [#allocation7], %s173
          %s175 = smul.u32 32, %s19
          %s177 = ssub.s32 4096, 4096
          %178 = vsyncadd %s171, %s177
          %s179 = smul.addr %s175, 128
          %s180 = scalar_lea.hbm %s2, %s179
          %s181 = sshll.u32 %s174, 4
          %s182 = int_to_ptr.vmem [resolvable:$true] %s181
          %187 = dma.hbm_to_vmem [thread:$0]  %s180, 4096, %s182, %s171, 128, 128, 8
        $region28: #{tpu_custom_call.1} parent=19 // pred_fallthru
          _
      $region20: #{tpu_custom_call.1} parent=5 // pred_fallthru
        _
      %p188 = scmp.le.s32.totalorder 1, %s19
      %p189 = scmp.lt.s32.totalorder %s19, 3
      %p190 = pnand %p188, %p189
      %p191 = pneg %p190
      // Predicated region
      $region29: #{tpu_custom_call.1} parent=5 // pred_check
        _
      $region30: #{tpu_custom_call.1} parent=5 // pred_check_branch
        %193 = sbr.rel (%p190) target = $region32
      $region31: #{tpu_custom_call.1} parent=5 // pred_region
        %s194 = ssub.s32 %s19, 1
        // Predicated region
        $region33: #{tpu_custom_call.1} parent=31 // pred_check
          %p195 = pneg %p40
        $region34: #{tpu_custom_call.1} parent=31 // pred_check_branch
          %197 = sbr.rel (%p195) target = $region36
        $region35: #{tpu_custom_call.1} parent=31 // pred_region
          %198 = dma.done [#allocation5], 16
        $region36: #{tpu_custom_call.1} parent=31 // pred_fallthru
          _
        %s199 = sand.u32 %s53, 1
        %s200 = scalar_lea.sflag [#allocation3], %s199
        %s201 = sand.u32 %s53, 1
        %s202 = smul.addr %s201, 256
        %s203 = scalar_lea.vmem [#allocation6], %s202
        // Predicated region
        $region37: #{tpu_custom_call.1} parent=31 // pred_check
          %p204 = pneg %p66
        $region38: #{tpu_custom_call.1} parent=31 // pred_check_branch
          %206 = sbr.rel (%p204) target = $region40
        $region39: #{tpu_custom_call.1} parent=31 // pred_region
          %207 = dma.done %s200, 4096
        $region40: #{tpu_custom_call.1} parent=31 // pred_fallthru
          _
        %s208 = sand.u32 %s79, 1
        %s209 = scalar_lea.sflag [#allocation8], %s208
        %s210 = sand.u32 %s79, 1
        %s211 = smul.addr %s210, 256
        %s212 = scalar_lea.vmem [#allocation7], %s211
        // Predicated region
        $region41: #{tpu_custom_call.1} parent=31 // pred_check
          %p213 = pneg %p92
        $region42: #{tpu_custom_call.1} parent=31 // pred_check_branch
          %215 = sbr.rel (%p213) target = $region44
        $region43: #{tpu_custom_call.1} parent=31 // pred_region
          %216 = dma.done %s209, 4096
        $region44: #{tpu_custom_call.1} parent=31 // pred_fallthru
          _
        %217 = sfence
        %p218 = pneg %p40
        %p219 = pneg %p37
        %s220 = sand.u32 %s53, 1
        %s221 = scalar_lea.sflag [#allocation3], %s220
        %s222 = sand.u32 %s53, 1
        %s223 = smul.addr %s222, 256
        %s224 = scalar_lea.vmem [#allocation6], %s223
        %p225 = pneg %p66
        %p226 = pneg %p63
        %s227 = sand.u32 %s79, 1
        %s228 = scalar_lea.sflag [#allocation8], %s227
        %s229 = sand.u32 %s79, 1
        %s230 = smul.addr %s229, 256
        %s231 = scalar_lea.vmem [#allocation7], %s230
        %p232 = pneg %p92
        %p233 = pneg %p89
        %p234 = pneg %p118
        %p235 = pneg %p115
        %s236 = sand.u32 %s105, 1
        %s237 = scalar_lea.sflag [#allocation4], %s236
        %s238 = sand.u32 %s105, 1
        %s239 = smul.addr %s238, 256
        %s240 = scalar_lea.vmem [#allocation9], %s239
        %s241 = smul.u32 32, %s24
        %s242 = smul.u32 32, %s24
        %s243 = smul.u32 32, %s24
        %v244 = vld [vmem:[%s203] sm:$0xff]
        %v245 = vld [vmem:[%s203 + $0x8] sm:$0xff]
        %v246 = vld [vmem:[%s203 + $0x10] sm:$0xff]
        %v247 = vld [vmem:[%s203 + $0x18] sm:$0xff]
        %v248 = vld [vmem:[%s203 + $0x20] sm:$0xff]
        %v249 = vld [vmem:[%s203 + $0x28] sm:$0xff]
        %v250 = vld [vmem:[%s203 + $0x30] sm:$0xff]
        %v251 = vld [vmem:[%s203 + $0x38] sm:$0xff]
        %v252 = vld [vmem:[%s203 + $0x40] sm:$0xff]
        %v253 = vld [vmem:[%s203 + $0x48] sm:$0xff]
        %v254 = vld [vmem:[%s203 + $0x50] sm:$0xff]
        %v255 = vld [vmem:[%s203 + $0x58] sm:$0xff]
        %v256 = vld [vmem:[%s203 + $0x60] sm:$0xff]
        %v257 = vld [vmem:[%s203 + $0x68] sm:$0xff]
        %v258 = vld [vmem:[%s203 + $0x70] sm:$0xff]
        %v259 = vld [vmem:[%s203 + $0x78] sm:$0xff]
        %v260 = vld [vmem:[%s203 + $0x80] sm:$0xff]
        %v261 = vld [vmem:[%s203 + $0x88] sm:$0xff]
        %v262 = vld [vmem:[%s203 + $0x90] sm:$0xff]
        %v263 = vld [vmem:[%s203 + $0x98] sm:$0xff]
        %v264 = vld [vmem:[%s203 + $0xa0] sm:$0xff]
        %v265 = vld [vmem:[%s203 + $0xa8] sm:$0xff]
        %v266 = vld [vmem:[%s203 + $0xb0] sm:$0xff]
        %v267 = vld [vmem:[%s203 + $0xb8] sm:$0xff]
        %v268 = vld [vmem:[%s203 + $0xc0] sm:$0xff]
        %v269 = vld [vmem:[%s203 + $0xc8] sm:$0xff]
        %v270 = vld [vmem:[%s203 + $0xd0] sm:$0xff]
        %v271 = vld [vmem:[%s203 + $0xd8] sm:$0xff]
        %v272 = vld [vmem:[%s203 + $0xe0] sm:$0xff]
        %v273 = vld [vmem:[%s203 + $0xe8] sm:$0xff]
        %v274 = vld [vmem:[%s203 + $0xf0] sm:$0xff]
        %v275 = vld [vmem:[%s203 + $0xf8] sm:$0xff]
        %v276 = vld [vmem:[%s212] sm:$0xff]
        %v277 = vld [vmem:[%s212 + $0x8] sm:$0xff]
        %v278 = vld [vmem:[%s212 + $0x10] sm:$0xff]
        %v279 = vld [vmem:[%s212 + $0x18] sm:$0xff]
        %v280 = vld [vmem:[%s212 + $0x20] sm:$0xff]
        %v281 = vld [vmem:[%s212 + $0x28] sm:$0xff]
        %v282 = vld [vmem:[%s212 + $0x30] sm:$0xff]
        %v283 = vld [vmem:[%s212 + $0x38] sm:$0xff]
        %v284 = vld [vmem:[%s212 + $0x40] sm:$0xff]
        %v285 = vld [vmem:[%s212 + $0x48] sm:$0xff]
        %v286 = vld [vmem:[%s212 + $0x50] sm:$0xff]
        %v287 = vld [vmem:[%s212 + $0x58] sm:$0xff]
        %v288 = vld [vmem:[%s212 + $0x60] sm:$0xff]
        %v289 = vld [vmem:[%s212 + $0x68] sm:$0xff]
        %v290 = vld [vmem:[%s212 + $0x70] sm:$0xff]
        %v291 = vld [vmem:[%s212 + $0x78] sm:$0xff]
        %v292 = vld [vmem:[%s212 + $0x80] sm:$0xff]
        %v293 = vld [vmem:[%s212 + $0x88] sm:$0xff]
        %v294 = vld [vmem:[%s212 + $0x90] sm:$0xff]
        %v295 = vld [vmem:[%s212 + $0x98] sm:$0xff]
        %v296 = vld [vmem:[%s212 + $0xa0] sm:$0xff]
        %v297 = vld [vmem:[%s212 + $0xa8] sm:$0xff]
        %v298 = vld [vmem:[%s212 + $0xb0] sm:$0xff]
        %v299 = vld [vmem:[%s212 + $0xb8] sm:$0xff]
        %v300 = vld [vmem:[%s212 + $0xc0] sm:$0xff]
        %v301 = vld [vmem:[%s212 + $0xc8] sm:$0xff]
        %v302 = vld [vmem:[%s212 + $0xd0] sm:$0xff]
        %v303 = vld [vmem:[%s212 + $0xd8] sm:$0xff]
        %v304 = vld [vmem:[%s212 + $0xe0] sm:$0xff]
        %v305 = vld [vmem:[%s212 + $0xe8] sm:$0xff]
        %v306 = vld [vmem:[%s212 + $0xf0] sm:$0xff]
        %v307 = vld [vmem:[%s212 + $0xf8] sm:$0xff]
        %s308 = sld [smem:[#allocation2]]
        %s309 = sld [smem:[#allocation2 + $0x1]]
        %s310 = sld [smem:[#allocation2 + $0x2]]
        %s311 = sld [smem:[#allocation2 + $0x3]]
        %s312 = sld [smem:[#allocation2 + $0x4]]
        %s313 = sld [smem:[#allocation2 + $0x5]]
        %v314 = vstv %s308
        %v315 = vmul.f32 %v314, %v244
        %v316 = vmul.f32 %v314, %v245
        %v317 = vmul.f32 %v314, %v246
        %v318 = vmul.f32 %v314, %v247
        %v319 = vmul.f32 %v314, %v248
        %v320 = vmul.f32 %v314, %v249
        %v321 = vmul.f32 %v314, %v250
        %v322 = vmul.f32 %v314, %v251
        %v323 = vmul.f32 %v314, %v252
        %v324 = vmul.f32 %v314, %v253
        %v325 = vmul.f32 %v314, %v254
        %v326 = vmul.f32 %v314, %v255
        %v327 = vmul.f32 %v314, %v256
        %v328 = vmul.f32 %v314, %v257
        %v329 = vmul.f32 %v314, %v258
        %v330 = vmul.f32 %v314, %v259
        %v331 = vmul.f32 %v314, %v260
        %v332 = vmul.f32 %v314, %v261
        %v333 = vmul.f32 %v314, %v262
        %v334 = vmul.f32 %v314, %v263
        %v335 = vmul.f32 %v314, %v264
        %v336 = vmul.f32 %v314, %v265
        %v337 = vmul.f32 %v314, %v266
        %v338 = vmul.f32 %v314, %v267
        %v339 = vmul.f32 %v314, %v268
        %v340 = vmul.f32 %v314, %v269
        %v341 = vmul.f32 %v314, %v270
        %v342 = vmul.f32 %v314, %v271
        %v343 = vmul.f32 %v314, %v272
        %v344 = vmul.f32 %v314, %v273
        %v345 = vmul.f32 %v314, %v274
        %v346 = vmul.f32 %v314, %v275
        %v347 = vstv %s309
        %v348 = vmul.f32 %v347, %v276
        %v349 = vmul.f32 %v347, %v277
        %v350 = vmul.f32 %v347, %v278
        %v351 = vmul.f32 %v347, %v279
        %v352 = vmul.f32 %v347, %v280
        %v353 = vmul.f32 %v347, %v281
        %v354 = vmul.f32 %v347, %v282
        %v355 = vmul.f32 %v347, %v283
        %v356 = vmul.f32 %v347, %v284
        %v357 = vmul.f32 %v347, %v285
        %v358 = vmul.f32 %v347, %v286
        %v359 = vmul.f32 %v347, %v287
        %v360 = vmul.f32 %v347, %v288
        %v361 = vmul.f32 %v347, %v289
        %v362 = vmul.f32 %v347, %v290
        %v363 = vmul.f32 %v347, %v291
        %v364 = vmul.f32 %v347, %v292
        %v365 = vmul.f32 %v347, %v293
        %v366 = vmul.f32 %v347, %v294
        %v367 = vmul.f32 %v347, %v295
        %v368 = vmul.f32 %v347, %v296
        %v369 = vmul.f32 %v347, %v297
        %v370 = vmul.f32 %v347, %v298
        %v371 = vmul.f32 %v347, %v299
        %v372 = vmul.f32 %v347, %v300
        %v373 = vmul.f32 %v347, %v301
        %v374 = vmul.f32 %v347, %v302
        %v375 = vmul.f32 %v347, %v303
        %v376 = vmul.f32 %v347, %v304
        %v377 = vmul.f32 %v347, %v305
        %v378 = vmul.f32 %v347, %v306
        %v379 = vmul.f32 %v347, %v307
        %v380 = vadd.f32 %v315, %v348
        %v381 = vadd.f32 %v316, %v349
        %v382 = vadd.f32 %v317, %v350
        %v383 = vadd.f32 %v318, %v351
        %v384 = vadd.f32 %v319, %v352
        %v385 = vadd.f32 %v320, %v353
        %v386 = vadd.f32 %v321, %v354
        %v387 = vadd.f32 %v322, %v355
        %v388 = vadd.f32 %v323, %v356
        %v389 = vadd.f32 %v324, %v357
        %v390 = vadd.f32 %v325, %v358
        %v391 = vadd.f32 %v326, %v359
        %v392 = vadd.f32 %v327, %v360
        %v393 = vadd.f32 %v328, %v361
        %v394 = vadd.f32 %v329, %v362
        %v395 = vadd.f32 %v330, %v363
        %v396 = vadd.f32 %v331, %v364
        %v397 = vadd.f32 %v332, %v365
        %v398 = vadd.f32 %v333, %v366
        %v399 = vadd.f32 %v334, %v367
        %v400 = vadd.f32 %v335, %v368
        %v401 = vadd.f32 %v336, %v369
        %v402 = vadd.f32 %v337, %v370
        %v403 = vadd.f32 %v338, %v371
        %v404 = vadd.f32 %v339, %v372
        %v405 = vadd.f32 %v340, %v373
        %v406 = vadd.f32 %v341, %v374
        %v407 = vadd.f32 %v342, %v375
        %v408 = vadd.f32 %v343, %v376
        %v409 = vadd.f32 %v344, %v377
        %v410 = vadd.f32 %v345, %v378
        %v411 = vadd.f32 %v346, %v379
        %v412 = vmul.f32 %v314, %v276
        %v413 = vmul.f32 %v314, %v277
        %v414 = vmul.f32 %v314, %v278
        %v415 = vmul.f32 %v314, %v279
        %v416 = vmul.f32 %v314, %v280
        %v417 = vmul.f32 %v314, %v281
        %v418 = vmul.f32 %v314, %v282
        %v419 = vmul.f32 %v314, %v283
        %v420 = vmul.f32 %v314, %v284
        %v421 = vmul.f32 %v314, %v285
        %v422 = vmul.f32 %v314, %v286
        %v423 = vmul.f32 %v314, %v287
        %v424 = vmul.f32 %v314, %v288
        %v425 = vmul.f32 %v314, %v289
        %v426 = vmul.f32 %v314, %v290
        %v427 = vmul.f32 %v314, %v291
        %v428 = vmul.f32 %v314, %v292
        %v429 = vmul.f32 %v314, %v293
        %v430 = vmul.f32 %v314, %v294
        %v431 = vmul.f32 %v314, %v295
        %v432 = vmul.f32 %v314, %v296
        %v433 = vmul.f32 %v314, %v297
        %v434 = vmul.f32 %v314, %v298
        %v435 = vmul.f32 %v314, %v299
        %v436 = vmul.f32 %v314, %v300
        %v437 = vmul.f32 %v314, %v301
        %v438 = vmul.f32 %v314, %v302
        %v439 = vmul.f32 %v314, %v303
        %v440 = vmul.f32 %v314, %v304
        %v441 = vmul.f32 %v314, %v305
        %v442 = vmul.f32 %v314, %v306
        %v443 = vmul.f32 %v314, %v307
        %v444 = vmul.f32 %v347, %v244
        %v445 = vmul.f32 %v347, %v245
        %v446 = vmul.f32 %v347, %v246
        %v447 = vmul.f32 %v347, %v247
        %v448 = vmul.f32 %v347, %v248
        %v449 = vmul.f32 %v347, %v249
        %v450 = vmul.f32 %v347, %v250
        %v451 = vmul.f32 %v347, %v251
        %v452 = vmul.f32 %v347, %v252
        %v453 = vmul.f32 %v347, %v253
        %v454 = vmul.f32 %v347, %v254
        %v455 = vmul.f32 %v347, %v255
        %v456 = vmul.f32 %v347, %v256
        %v457 = vmul.f32 %v347, %v257
        %v458 = vmul.f32 %v347, %v258
        %v459 = vmul.f32 %v347, %v259
        %v460 = vmul.f32 %v347, %v260
        %v461 = vmul.f32 %v347, %v261
        %v462 = vmul.f32 %v347, %v262
        %v463 = vmul.f32 %v347, %v263
        %v464 = vmul.f32 %v347, %v264
        %v465 = vmul.f32 %v347, %v265
        %v466 = vmul.f32 %v347, %v266
        %v467 = vmul.f32 %v347, %v267
        %v468 = vmul.f32 %v347, %v268
        %v469 = vmul.f32 %v347, %v269
        %v470 = vmul.f32 %v347, %v270
        %v471 = vmul.f32 %v347, %v271
        %v472 = vmul.f32 %v347, %v272
        %v473 = vmul.f32 %v347, %v273
        %v474 = vmul.f32 %v347, %v274
        %v475 = vmul.f32 %v347, %v275
        %v476 = vsub.f32 %v412, %v444
        %v477 = vsub.f32 %v413, %v445
        %v478 = vsub.f32 %v414, %v446
        %v479 = vsub.f32 %v415, %v447
        %v480 = vsub.f32 %v416, %v448
        %v481 = vsub.f32 %v417, %v449
        %v482 = vsub.f32 %v418, %v450
        %v483 = vsub.f32 %v419, %v451
        %v484 = vsub.f32 %v420, %v452
        %v485 = vsub.f32 %v421, %v453
        %v486 = vsub.f32 %v422, %v454
        %v487 = vsub.f32 %v423, %v455
        %v488 = vsub.f32 %v424, %v456
        %v489 = vsub.f32 %v425, %v457
        %v490 = vsub.f32 %v426, %v458
        %v491 = vsub.f32 %v427, %v459
        %v492 = vsub.f32 %v428, %v460
        %v493 = vsub.f32 %v429, %v461
        %v494 = vsub.f32 %v430, %v462
        %v495 = vsub.f32 %v431, %v463
        %v496 = vsub.f32 %v432, %v464
        %v497 = vsub.f32 %v433, %v465
        %v498 = vsub.f32 %v434, %v466
        %v499 = vsub.f32 %v435, %v467
        %v500 = vsub.f32 %v436, %v468
        %v501 = vsub.f32 %v437, %v469
        %v502 = vsub.f32 %v438, %v470
        %v503 = vsub.f32 %v439, %v471
        %v504 = vsub.f32 %v440, %v472
        %v505 = vsub.f32 %v441, %v473
        %v506 = vsub.f32 %v442, %v474
        %v507 = vsub.f32 %v443, %v475
        %v508 = vstv %s310
        %v509 = vsub.f32 %v380, %v508
        %v510 = vsub.f32 %v381, %v508
        %v511 = vsub.f32 %v382, %v508
        %v512 = vsub.f32 %v383, %v508
        %v513 = vsub.f32 %v384, %v508
        %v514 = vsub.f32 %v385, %v508
        %v515 = vsub.f32 %v386, %v508
        %v516 = vsub.f32 %v387, %v508
        %v517 = vsub.f32 %v388, %v508
        %v518 = vsub.f32 %v389, %v508
        %v519 = vsub.f32 %v390, %v508
        %v520 = vsub.f32 %v391, %v508
        %v521 = vsub.f32 %v392, %v508
        %v522 = vsub.f32 %v393, %v508
        %v523 = vsub.f32 %v394, %v508
        %v524 = vsub.f32 %v395, %v508
        %v525 = vsub.f32 %v396, %v508
        %v526 = vsub.f32 %v397, %v508
        %v527 = vsub.f32 %v398, %v508
        %v528 = vsub.f32 %v399, %v508
        %v529 = vsub.f32 %v400, %v508
        %v530 = vsub.f32 %v401, %v508
        %v531 = vsub.f32 %v402, %v508
        %v532 = vsub.f32 %v403, %v508
        %v533 = vsub.f32 %v404, %v508
        %v534 = vsub.f32 %v405, %v508
        %v535 = vsub.f32 %v406, %v508
        %v536 = vsub.f32 %v407, %v508
        %v537 = vsub.f32 %v408, %v508
        %v538 = vsub.f32 %v409, %v508
        %v539 = vsub.f32 %v410, %v508
        %v540 = vsub.f32 %v411, %v508
        %v541 = vand.u32 2147483647, %v509
        %v542 = vand.u32 2147483647, %v510
        %v543 = vand.u32 2147483647, %v511
        %v544 = vand.u32 2147483647, %v512
        %v545 = vand.u32 2147483647, %v513
        %v546 = vand.u32 2147483647, %v514
        %v547 = vand.u32 2147483647, %v515
        %v548 = vand.u32 2147483647, %v516
        %v549 = vand.u32 2147483647, %v517
        %v550 = vand.u32 2147483647, %v518
        %v551 = vand.u32 2147483647, %v519
        %v552 = vand.u32 2147483647, %v520
        %v553 = vand.u32 2147483647, %v521
        %v554 = vand.u32 2147483647, %v522
        %v555 = vand.u32 2147483647, %v523
        %v556 = vand.u32 2147483647, %v524
        %v557 = vand.u32 2147483647, %v525
        %v558 = vand.u32 2147483647, %v526
        %v559 = vand.u32 2147483647, %v527
        %v560 = vand.u32 2147483647, %v528
        %v561 = vand.u32 2147483647, %v529
        %v562 = vand.u32 2147483647, %v530
        %v563 = vand.u32 2147483647, %v531
        %v564 = vand.u32 2147483647, %v532
        %v565 = vand.u32 2147483647, %v533
        %v566 = vand.u32 2147483647, %v534
        %v567 = vand.u32 2147483647, %v535
        %v568 = vand.u32 2147483647, %v536
        %v569 = vand.u32 2147483647, %v537
        %v570 = vand.u32 2147483647, %v538
        %v571 = vand.u32 2147483647, %v539
        %v572 = vand.u32 2147483647, %v540
        %v573 = vstv %s312
        %v574 = vsub.f32 %v541, %v573
        %v575 = vsub.f32 %v542, %v573
        %v576 = vsub.f32 %v543, %v573
        %v577 = vsub.f32 %v544, %v573
        %v578 = vsub.f32 %v545, %v573
        %v579 = vsub.f32 %v546, %v573
        %v580 = vsub.f32 %v547, %v573
        %v581 = vsub.f32 %v548, %v573
        %v582 = vsub.f32 %v549, %v573
        %v583 = vsub.f32 %v550, %v573
        %v584 = vsub.f32 %v551, %v573
        %v585 = vsub.f32 %v552, %v573
        %v586 = vsub.f32 %v553, %v573
        %v587 = vsub.f32 %v554, %v573
        %v588 = vsub.f32 %v555, %v573
        %v589 = vsub.f32 %v556, %v573
        %v590 = vsub.f32 %v557, %v573
        %v591 = vsub.f32 %v558, %v573
        %v592 = vsub.f32 %v559, %v573
        %v593 = vsub.f32 %v560, %v573
        %v594 = vsub.f32 %v561, %v573
        %v595 = vsub.f32 %v562, %v573
        %v596 = vsub.f32 %v563, %v573
        %v597 = vsub.f32 %v564, %v573
        %v598 = vsub.f32 %v565, %v573
        %v599 = vsub.f32 %v566, %v573
        %v600 = vsub.f32 %v567, %v573
        %v601 = vsub.f32 %v568, %v573
        %v602 = vsub.f32 %v569, %v573
        %v603 = vsub.f32 %v570, %v573
        %v604 = vsub.f32 %v571, %v573
        %v605 = vsub.f32 %v572, %v573
        %v606 = vstv %s311
        %v607 = vsub.f32 %v476, %v606
        %v608 = vsub.f32 %v477, %v606
        %v609 = vsub.f32 %v478, %v606
        %v610 = vsub.f32 %v479, %v606
        %v611 = vsub.f32 %v480, %v606
        %v612 = vsub.f32 %v481, %v606
        %v613 = vsub.f32 %v482, %v606
        %v614 = vsub.f32 %v483, %v606
        %v615 = vsub.f32 %v484, %v606
        %v616 = vsub.f32 %v485, %v606
        %v617 = vsub.f32 %v486, %v606
        %v618 = vsub.f32 %v487, %v606
        %v619 = vsub.f32 %v488, %v606
        %v620 = vsub.f32 %v489, %v606
        %v621 = vsub.f32 %v490, %v606
        %v622 = vsub.f32 %v491, %v606
        %v623 = vsub.f32 %v492, %v606
        %v624 = vsub.f32 %v493, %v606
        %v625 = vsub.f32 %v494, %v606
        %v626 = vsub.f32 %v495, %v606
        %v627 = vsub.f32 %v496, %v606
        %v628 = vsub.f32 %v497, %v606
        %v629 = vsub.f32 %v498, %v606
        %v630 = vsub.f32 %v499, %v606
        %v631 = vsub.f32 %v500, %v606
        %v632 = vsub.f32 %v501, %v606
        %v633 = vsub.f32 %v502, %v606
        %v634 = vsub.f32 %v503, %v606
        %v635 = vsub.f32 %v504, %v606
        %v636 = vsub.f32 %v505, %v606
        %v637 = vsub.f32 %v506, %v606
        %v638 = vsub.f32 %v507, %v606
        %v639 = vand.u32 2147483647, %v607
        %v640 = vand.u32 2147483647, %v608
        %v641 = vand.u32 2147483647, %v609
        %v642 = vand.u32 2147483647, %v610
        %v643 = vand.u32 2147483647, %v611
        %v644 = vand.u32 2147483647, %v612
        %v645 = vand.u32 2147483647, %v613
        %v646 = vand.u32 2147483647, %v614
        %v647 = vand.u32 2147483647, %v615
        %v648 = vand.u32 2147483647, %v616
        %v649 = vand.u32 2147483647, %v617
        %v650 = vand.u32 2147483647, %v618
        %v651 = vand.u32 2147483647, %v619
        %v652 = vand.u32 2147483647, %v620
        %v653 = vand.u32 2147483647, %v621
        %v654 = vand.u32 2147483647, %v622
        %v655 = vand.u32 2147483647, %v623
        %v656 = vand.u32 2147483647, %v624
        %v657 = vand.u32 2147483647, %v625
        %v658 = vand.u32 2147483647, %v626
        %v659 = vand.u32 2147483647, %v627
        %v660 = vand.u32 2147483647, %v628
        %v661 = vand.u32 2147483647, %v629
        %v662 = vand.u32 2147483647, %v630
        %v663 = vand.u32 2147483647, %v631
        %v664 = vand.u32 2147483647, %v632
        %v665 = vand.u32 2147483647, %v633
        %v666 = vand.u32 2147483647, %v634
        %v667 = vand.u32 2147483647, %v635
        %v668 = vand.u32 2147483647, %v636
        %v669 = vand.u32 2147483647, %v637
        %v670 = vand.u32 2147483647, %v638
        %v671 = vstv %s313
        %v672 = vsub.f32 %v639, %v671
        %v673 = vsub.f32 %v640, %v671
        %v674 = vsub.f32 %v641, %v671
        %v675 = vsub.f32 %v642, %v671
        %v676 = vsub.f32 %v643, %v671
        %v677 = vsub.f32 %v644, %v671
        %v678 = vsub.f32 %v645, %v671
        %v679 = vsub.f32 %v646, %v671
        %v680 = vsub.f32 %v647, %v671
        %v681 = vsub.f32 %v648, %v671
        %v682 = vsub.f32 %v649, %v671
        %v683 = vsub.f32 %v650, %v671
        %v684 = vsub.f32 %v651, %v671
        %v685 = vsub.f32 %v652, %v671
        %v686 = vsub.f32 %v653, %v671
        %v687 = vsub.f32 %v654, %v671
        %v688 = vsub.f32 %v655, %v671
        %v689 = vsub.f32 %v656, %v671
        %v690 = vsub.f32 %v657, %v671
        %v691 = vsub.f32 %v658, %v671
        %v692 = vsub.f32 %v659, %v671
        %v693 = vsub.f32 %v660, %v671
        %v694 = vsub.f32 %v661, %v671
        %v695 = vsub.f32 %v662, %v671
        %v696 = vsub.f32 %v663, %v671
        %v697 = vsub.f32 %v664, %v671
        %v698 = vsub.f32 %v665, %v671
        %v699 = vsub.f32 %v666, %v671
        %v700 = vsub.f32 %v667, %v671
        %v701 = vsub.f32 %v668, %v671
        %v702 = vsub.f32 %v669, %v671
        %v703 = vsub.f32 %v670, %v671
        %v704 = vmax.f32 %v574, 0.0
        %v705 = vmax.f32 %v575, 0.0
        %v706 = vmax.f32 %v576, 0.0
        %v707 = vmax.f32 %v577, 0.0
        %v708 = vmax.f32 %v578, 0.0
        %v709 = vmax.f32 %v579, 0.0
        %v710 = vmax.f32 %v580, 0.0
        %v711 = vmax.f32 %v581, 0.0
        %v712 = vmax.f32 %v582, 0.0
        %v713 = vmax.f32 %v583, 0.0
        %v714 = vmax.f32 %v584, 0.0
        %v715 = vmax.f32 %v585, 0.0
        %v716 = vmax.f32 %v586, 0.0
        %v717 = vmax.f32 %v587, 0.0
        %v718 = vmax.f32 %v588, 0.0
        %v719 = vmax.f32 %v589, 0.0
        %v720 = vmax.f32 %v590, 0.0
        %v721 = vmax.f32 %v591, 0.0
        %v722 = vmax.f32 %v592, 0.0
        %v723 = vmax.f32 %v593, 0.0
        %v724 = vmax.f32 %v594, 0.0
        %v725 = vmax.f32 %v595, 0.0
        %v726 = vmax.f32 %v596, 0.0
        %v727 = vmax.f32 %v597, 0.0
        %v728 = vmax.f32 %v598, 0.0
        %v729 = vmax.f32 %v599, 0.0
        %v730 = vmax.f32 %v600, 0.0
        %v731 = vmax.f32 %v601, 0.0
        %v732 = vmax.f32 %v602, 0.0
        %v733 = vmax.f32 %v603, 0.0
        %v734 = vmax.f32 %v604, 0.0
        %v735 = vmax.f32 %v605, 0.0
        %v736 = vmax.f32 %v672, 0.0
        %v737 = vmax.f32 %v673, 0.0
        %v738 = vmax.f32 %v674, 0.0
        %v739 = vmax.f32 %v675, 0.0
        %v740 = vmax.f32 %v676, 0.0
        %v741 = vmax.f32 %v677, 0.0
        %v742 = vmax.f32 %v678, 0.0
        %v743 = vmax.f32 %v679, 0.0
        %v744 = vmax.f32 %v680, 0.0
        %v745 = vmax.f32 %v681, 0.0
        %v746 = vmax.f32 %v682, 0.0
        %v747 = vmax.f32 %v683, 0.0
        %v748 = vmax.f32 %v684, 0.0
        %v749 = vmax.f32 %v685, 0.0
        %v750 = vmax.f32 %v686, 0.0
        %v751 = vmax.f32 %v687, 0.0
        %v752 = vmax.f32 %v688, 0.0
        %v753 = vmax.f32 %v689, 0.0
        %v754 = vmax.f32 %v690, 0.0
        %v755 = vmax.f32 %v691, 0.0
        %v756 = vmax.f32 %v692, 0.0
        %v757 = vmax.f32 %v693, 0.0
        %v758 = vmax.f32 %v694, 0.0
        %v759 = vmax.f32 %v695, 0.0
        %v760 = vmax.f32 %v696, 0.0
        %v761 = vmax.f32 %v697, 0.0
        %v762 = vmax.f32 %v698, 0.0
        %v763 = vmax.f32 %v699, 0.0
        %v764 = vmax.f32 %v700, 0.0
        %v765 = vmax.f32 %v701, 0.0
        %v766 = vmax.f32 %v702, 0.0
        %v767 = vmax.f32 %v703, 0.0
        %v768 = vmul.f32 %v704, %v704
        %v769 = vmul.f32 %v705, %v705
        %v770 = vmul.f32 %v706, %v706
        %v771 = vmul.f32 %v707, %v707
        %v772 = vmul.f32 %v708, %v708
        %v773 = vmul.f32 %v709, %v709
        %v774 = vmul.f32 %v710, %v710
        %v775 = vmul.f32 %v711, %v711
        %v776 = vmul.f32 %v712, %v712
        %v777 = vmul.f32 %v713, %v713
        %v778 = vmul.f32 %v714, %v714
        %v779 = vmul.f32 %v715, %v715
        %v780 = vmul.f32 %v716, %v716
        %v781 = vmul.f32 %v717, %v717
        %v782 = vmul.f32 %v718, %v718
        %v783 = vmul.f32 %v719, %v719
        %v784 = vmul.f32 %v720, %v720
        %v785 = vmul.f32 %v721, %v721
        %v786 = vmul.f32 %v722, %v722
        %v787 = vmul.f32 %v723, %v723
        %v788 = vmul.f32 %v724, %v724
        %v789 = vmul.f32 %v725, %v725
        %v790 = vmul.f32 %v726, %v726
        %v791 = vmul.f32 %v727, %v727
        %v792 = vmul.f32 %v728, %v728
        %v793 = vmul.f32 %v729, %v729
        %v794 = vmul.f32 %v730, %v730
        %v795 = vmul.f32 %v731, %v731
        %v796 = vmul.f32 %v732, %v732
        %v797 = vmul.f32 %v733, %v733
        %v798 = vmul.f32 %v734, %v734
        %v799 = vmul.f32 %v735, %v735
        %v800 = vmul.f32 %v736, %v736
        %v801 = vmul.f32 %v737, %v737
        %v802 = vmul.f32 %v738, %v738
        %v803 = vmul.f32 %v739, %v739
        %v804 = vmul.f32 %v740, %v740
        %v805 = vmul.f32 %v741, %v741
        %v806 = vmul.f32 %v742, %v742
        %v807 = vmul.f32 %v743, %v743
        %v808 = vmul.f32 %v744, %v744
        %v809 = vmul.f32 %v745, %v745
        %v810 = vmul.f32 %v746, %v746
        %v811 = vmul.f32 %v747, %v747
        %v812 = vmul.f32 %v748, %v748
        %v813 = vmul.f32 %v749, %v749
        %v814 = vmul.f32 %v750, %v750
        %v815 = vmul.f32 %v751, %v751
        %v816 = vmul.f32 %v752, %v752
        %v817 = vmul.f32 %v753, %v753
        %v818 = vmul.f32 %v754, %v754
        %v819 = vmul.f32 %v755, %v755
        %v820 = vmul.f32 %v756, %v756
        %v821 = vmul.f32 %v757, %v757
        %v822 = vmul.f32 %v758, %v758
        %v823 = vmul.f32 %v759, %v759
        %v824 = vmul.f32 %v760, %v760
        %v825 = vmul.f32 %v761, %v761
        %v826 = vmul.f32 %v762, %v762
        %v827 = vmul.f32 %v763, %v763
        %v828 = vmul.f32 %v764, %v764
        %v829 = vmul.f32 %v765, %v765
        %v830 = vmul.f32 %v766, %v766
        %v831 = vmul.f32 %v767, %v767
        %v832 = vadd.f32 %v768, %v800
        %v833 = vadd.f32 %v769, %v801
        %v834 = vadd.f32 %v770, %v802
        %v835 = vadd.f32 %v771, %v803
        %v836 = vadd.f32 %v772, %v804
        %v837 = vadd.f32 %v773, %v805
        %v838 = vadd.f32 %v774, %v806
        %v839 = vadd.f32 %v775, %v807
        %v840 = vadd.f32 %v776, %v808
        %v841 = vadd.f32 %v777, %v809
        %v842 = vadd.f32 %v778, %v810
        %v843 = vadd.f32 %v779, %v811
        %v844 = vadd.f32 %v780, %v812
        %v845 = vadd.f32 %v781, %v813
        %v846 = vadd.f32 %v782, %v814
        %v847 = vadd.f32 %v783, %v815
        %v848 = vadd.f32 %v784, %v816
        %v849 = vadd.f32 %v785, %v817
        %v850 = vadd.f32 %v786, %v818
        %v851 = vadd.f32 %v787, %v819
        %v852 = vadd.f32 %v788, %v820
        %v853 = vadd.f32 %v789, %v821
        %v854 = vadd.f32 %v790, %v822
        %v855 = vadd.f32 %v791, %v823
        %v856 = vadd.f32 %v792, %v824
        %v857 = vadd.f32 %v793, %v825
        %v858 = vadd.f32 %v794, %v826
        %v859 = vadd.f32 %v795, %v827
        %v860 = vadd.f32 %v796, %v828
        %v861 = vadd.f32 %v797, %v829
        %v862 = vadd.f32 %v798, %v830
        %v863 = vadd.f32 %v799, %v831
        %v864 = vrsqrt.pop %v832
        %v865 = vmul.f32 %v832, %v864
        %vm866 = vcmp.eq.f32.partialorder %v832, inf
        %v867 = vsel %vm866, %v832, %v865
        %vm868 = vcmp.eq.f32.partialorder %v832, 0.0
        %v869 = vand.u32 %v832, 2147483648
        %v870 = vsel %vm868, %v869, %v867
        %v871 = vrsqrt.pop %v833
        %v872 = vmul.f32 %v833, %v871
        %vm873 = vcmp.eq.f32.partialorder %v833, inf
        %v874 = vsel %vm873, %v833, %v872
        %vm875 = vcmp.eq.f32.partialorder %v833, 0.0
        %v876 = vand.u32 %v833, 2147483648
        %v877 = vsel %vm875, %v876, %v874
        %v878 = vrsqrt.pop %v834
        %v879 = vmul.f32 %v834, %v878
        %vm880 = vcmp.eq.f32.partialorder %v834, inf
        %v881 = vsel %vm880, %v834, %v879
        %vm882 = vcmp.eq.f32.partialorder %v834, 0.0
        %v883 = vand.u32 %v834, 2147483648
        %v884 = vsel %vm882, %v883, %v881
        %v885 = vrsqrt.pop %v835
        %v886 = vmul.f32 %v835, %v885
        %vm887 = vcmp.eq.f32.partialorder %v835, inf
        %v888 = vsel %vm887, %v835, %v886
        %vm889 = vcmp.eq.f32.partialorder %v835, 0.0
        %v890 = vand.u32 %v835, 2147483648
        %v891 = vsel %vm889, %v890, %v888
        %v892 = vrsqrt.pop %v836
        %v893 = vmul.f32 %v836, %v892
        %vm894 = vcmp.eq.f32.partialorder %v836, inf
        %v895 = vsel %vm894, %v836, %v893
        %vm896 = vcmp.eq.f32.partialorder %v836, 0.0
        %v897 = vand.u32 %v836, 2147483648
        %v898 = vsel %vm896, %v897, %v895
        %v899 = vrsqrt.pop %v837
        %v900 = vmul.f32 %v837, %v899
        %vm901 = vcmp.eq.f32.partialorder %v837, inf
        %v902 = vsel %vm901, %v837, %v900
        %vm903 = vcmp.eq.f32.partialorder %v837, 0.0
        %v904 = vand.u32 %v837, 2147483648
        %v905 = vsel %vm903, %v904, %v902
        %v906 = vrsqrt.pop %v838
        %v907 = vmul.f32 %v838, %v906
        %vm908 = vcmp.eq.f32.partialorder %v838, inf
        %v909 = vsel %vm908, %v838, %v907
        %vm910 = vcmp.eq.f32.partialorder %v838, 0.0
        %v911 = vand.u32 %v838, 2147483648
        %v912 = vsel %vm910, %v911, %v909
        %v913 = vrsqrt.pop %v839
        %v914 = vmul.f32 %v839, %v913
        %vm915 = vcmp.eq.f32.partialorder %v839, inf
        %v916 = vsel %vm915, %v839, %v914
        %vm917 = vcmp.eq.f32.partialorder %v839, 0.0
        %v918 = vand.u32 %v839, 2147483648
        %v919 = vsel %vm917, %v918, %v916
        %v920 = vrsqrt.pop %v840
        %v921 = vmul.f32 %v840, %v920
        %vm922 = vcmp.eq.f32.partialorder %v840, inf
        %v923 = vsel %vm922, %v840, %v921
        %vm924 = vcmp.eq.f32.partialorder %v840, 0.0
        %v925 = vand.u32 %v840, 2147483648
        %v926 = vsel %vm924, %v925, %v923
        %v927 = vrsqrt.pop %v841
        %v928 = vmul.f32 %v841, %v927
        %vm929 = vcmp.eq.f32.partialorder %v841, inf
        %v930 = vsel %vm929, %v841, %v928
        %vm931 = vcmp.eq.f32.partialorder %v841, 0.0
        %v932 = vand.u32 %v841, 2147483648
        %v933 = vsel %vm931, %v932, %v930
        %v934 = vrsqrt.pop %v842
        %v935 = vmul.f32 %v842, %v934
        %vm936 = vcmp.eq.f32.partialorder %v842, inf
        %v937 = vsel %vm936, %v842, %v935
        %vm938 = vcmp.eq.f32.partialorder %v842, 0.0
        %v939 = vand.u32 %v842, 2147483648
        %v940 = vsel %vm938, %v939, %v937
        %v941 = vrsqrt.pop %v843
        %v942 = vmul.f32 %v843, %v941
        %vm943 = vcmp.eq.f32.partialorder %v843, inf
        %v944 = vsel %vm943, %v843, %v942
        %vm945 = vcmp.eq.f32.partialorder %v843, 0.0
        %v946 = vand.u32 %v843, 2147483648
        %v947 = vsel %vm945, %v946, %v944
        %v948 = vrsqrt.pop %v844
        %v949 = vmul.f32 %v844, %v948
        %vm950 = vcmp.eq.f32.partialorder %v844, inf
        %v951 = vsel %vm950, %v844, %v949
        %vm952 = vcmp.eq.f32.partialorder %v844, 0.0
        %v953 = vand.u32 %v844, 2147483648
        %v954 = vsel %vm952, %v953, %v951
        %v955 = vrsqrt.pop %v845
        %v956 = vmul.f32 %v845, %v955
        %vm957 = vcmp.eq.f32.partialorder %v845, inf
        %v958 = vsel %vm957, %v845, %v956
        %vm959 = vcmp.eq.f32.partialorder %v845, 0.0
        %v960 = vand.u32 %v845, 2147483648
        %v961 = vsel %vm959, %v960, %v958
        %v962 = vrsqrt.pop %v846
        %v963 = vmul.f32 %v846, %v962
        %vm964 = vcmp.eq.f32.partialorder %v846, inf
        %v965 = vsel %vm964, %v846, %v963
        %vm966 = vcmp.eq.f32.partialorder %v846, 0.0
        %v967 = vand.u32 %v846, 2147483648
        %v968 = vsel %vm966, %v967, %v965
        %v969 = vrsqrt.pop %v847
        %v970 = vmul.f32 %v847, %v969
        %vm971 = vcmp.eq.f32.partialorder %v847, inf
        %v972 = vsel %vm971, %v847, %v970
        %vm973 = vcmp.eq.f32.partialorder %v847, 0.0
        %v974 = vand.u32 %v847, 2147483648
        %v975 = vsel %vm973, %v974, %v972
        %v976 = vrsqrt.pop %v848
        %v977 = vmul.f32 %v848, %v976
        %vm978 = vcmp.eq.f32.partialorder %v848, inf
        %v979 = vsel %vm978, %v848, %v977
        %vm980 = vcmp.eq.f32.partialorder %v848, 0.0
        %v981 = vand.u32 %v848, 2147483648
        %v982 = vsel %vm980, %v981, %v979
        %v983 = vrsqrt.pop %v849
        %v984 = vmul.f32 %v849, %v983
        %vm985 = vcmp.eq.f32.partialorder %v849, inf
        %v986 = vsel %vm985, %v849, %v984
        %vm987 = vcmp.eq.f32.partialorder %v849, 0.0
        %v988 = vand.u32 %v849, 2147483648
        %v989 = vsel %vm987, %v988, %v986
        %v990 = vrsqrt.pop %v850
        %v991 = vmul.f32 %v850, %v990
        %vm992 = vcmp.eq.f32.partialorder %v850, inf
        %v993 = vsel %vm992, %v850, %v991
        %vm994 = vcmp.eq.f32.partialorder %v850, 0.0
        %v995 = vand.u32 %v850, 2147483648
        %v996 = vsel %vm994, %v995, %v993
        %v997 = vrsqrt.pop %v851
        %v998 = vmul.f32 %v851, %v997
        %vm999 = vcmp.eq.f32.partialorder %v851, inf
        %v1000 = vsel %vm999, %v851, %v998
        %vm1001 = vcmp.eq.f32.partialorder %v851, 0.0
        %v1002 = vand.u32 %v851, 2147483648
        %v1003 = vsel %vm1001, %v1002, %v1000
        %v1004 = vrsqrt.pop %v852
        %v1005 = vmul.f32 %v852, %v1004
        %vm1006 = vcmp.eq.f32.partialorder %v852, inf
        %v1007 = vsel %vm1006, %v852, %v1005
        %vm1008 = vcmp.eq.f32.partialorder %v852, 0.0
        %v1009 = vand.u32 %v852, 2147483648
        %v1010 = vsel %vm1008, %v1009, %v1007
        %v1011 = vrsqrt.pop %v853
        %v1012 = vmul.f32 %v853, %v1011
        %vm1013 = vcmp.eq.f32.partialorder %v853, inf
        %v1014 = vsel %vm1013, %v853, %v1012
        %vm1015 = vcmp.eq.f32.partialorder %v853, 0.0
        %v1016 = vand.u32 %v853, 2147483648
        %v1017 = vsel %vm1015, %v1016, %v1014
        %v1018 = vrsqrt.pop %v854
        %v1019 = vmul.f32 %v854, %v1018
        %vm1020 = vcmp.eq.f32.partialorder %v854, inf
        %v1021 = vsel %vm1020, %v854, %v1019
        %vm1022 = vcmp.eq.f32.partialorder %v854, 0.0
        %v1023 = vand.u32 %v854, 2147483648
        %v1024 = vsel %vm1022, %v1023, %v1021
        %v1025 = vrsqrt.pop %v855
        %v1026 = vmul.f32 %v855, %v1025
        %vm1027 = vcmp.eq.f32.partialorder %v855, inf
        %v1028 = vsel %vm1027, %v855, %v1026
        %vm1029 = vcmp.eq.f32.partialorder %v855, 0.0
        %v1030 = vand.u32 %v855, 2147483648
        %v1031 = vsel %vm1029, %v1030, %v1028
        %v1032 = vrsqrt.pop %v856
        %v1033 = vmul.f32 %v856, %v1032
        %vm1034 = vcmp.eq.f32.partialorder %v856, inf
        %v1035 = vsel %vm1034, %v856, %v1033
        %vm1036 = vcmp.eq.f32.partialorder %v856, 0.0
        %v1037 = vand.u32 %v856, 2147483648
        %v1038 = vsel %vm1036, %v1037, %v1035
        %v1039 = vrsqrt.pop %v857
        %v1040 = vmul.f32 %v857, %v1039
        %vm1041 = vcmp.eq.f32.partialorder %v857, inf
        %v1042 = vsel %vm1041, %v857, %v1040
        %vm1043 = vcmp.eq.f32.partialorder %v857, 0.0
        %v1044 = vand.u32 %v857, 2147483648
        %v1045 = vsel %vm1043, %v1044, %v1042
        %v1046 = vrsqrt.pop %v858
        %v1047 = vmul.f32 %v858, %v1046
        %vm1048 = vcmp.eq.f32.partialorder %v858, inf
        %v1049 = vsel %vm1048, %v858, %v1047
        %vm1050 = vcmp.eq.f32.partialorder %v858, 0.0
        %v1051 = vand.u32 %v858, 2147483648
        %v1052 = vsel %vm1050, %v1051, %v1049
        %v1053 = vrsqrt.pop %v859
        %v1054 = vmul.f32 %v859, %v1053
        %vm1055 = vcmp.eq.f32.partialorder %v859, inf
        %v1056 = vsel %vm1055, %v859, %v1054
        %vm1057 = vcmp.eq.f32.partialorder %v859, 0.0
        %v1058 = vand.u32 %v859, 2147483648
        %v1059 = vsel %vm1057, %v1058, %v1056
        %v1060 = vrsqrt.pop %v860
        %v1061 = vmul.f32 %v860, %v1060
        %vm1062 = vcmp.eq.f32.partialorder %v860, inf
        %v1063 = vsel %vm1062, %v860, %v1061
        %vm1064 = vcmp.eq.f32.partialorder %v860, 0.0
        %v1065 = vand.u32 %v860, 2147483648
        %v1066 = vsel %vm1064, %v1065, %v1063
        %v1067 = vrsqrt.pop %v861
        %v1068 = vmul.f32 %v861, %v1067
        %vm1069 = vcmp.eq.f32.partialorder %v861, inf
        %v1070 = vsel %vm1069, %v861, %v1068
        %vm1071 = vcmp.eq.f32.partialorder %v861, 0.0
        %v1072 = vand.u32 %v861, 2147483648
        %v1073 = vsel %vm1071, %v1072, %v1070
        %v1074 = vrsqrt.pop %v862
        %v1075 = vmul.f32 %v862, %v1074
        %vm1076 = vcmp.eq.f32.partialorder %v862, inf
        %v1077 = vsel %vm1076, %v862, %v1075
        %vm1078 = vcmp.eq.f32.partialorder %v862, 0.0
        %v1079 = vand.u32 %v862, 2147483648
        %v1080 = vsel %vm1078, %v1079, %v1077
        %v1081 = vrsqrt.pop %v863
        %v1082 = vmul.f32 %v863, %v1081
        %vm1083 = vcmp.eq.f32.partialorder %v863, inf
        %v1084 = vsel %vm1083, %v863, %v1082
        %vm1085 = vcmp.eq.f32.partialorder %v863, 0.0
        %v1086 = vand.u32 %v863, 2147483648
        %v1087 = vsel %vm1085, %v1086, %v1084
        %v1088 = vmax.f32 %v574, %v672
        %v1089 = vmax.f32 %v575, %v673
        %v1090 = vmax.f32 %v576, %v674
        %v1091 = vmax.f32 %v577, %v675
        %v1092 = vmax.f32 %v578, %v676
        %v1093 = vmax.f32 %v579, %v677
        %v1094 = vmax.f32 %v580, %v678
        %v1095 = vmax.f32 %v581, %v679
        %v1096 = vmax.f32 %v582, %v680
        %v1097 = vmax.f32 %v583, %v681
        %v1098 = vmax.f32 %v584, %v682
        %v1099 = vmax.f32 %v585, %v683
        %v1100 = vmax.f32 %v586, %v684
        %v1101 = vmax.f32 %v587, %v685
        %v1102 = vmax.f32 %v588, %v686
        %v1103 = vmax.f32 %v589, %v687
        %v1104 = vmax.f32 %v590, %v688
        %v1105 = vmax.f32 %v591, %v689
        %v1106 = vmax.f32 %v592, %v690
        %v1107 = vmax.f32 %v593, %v691
        %v1108 = vmax.f32 %v594, %v692
        %v1109 = vmax.f32 %v595, %v693
        %v1110 = vmax.f32 %v596, %v694
        %v1111 = vmax.f32 %v597, %v695
        %v1112 = vmax.f32 %v598, %v696
        %v1113 = vmax.f32 %v599, %v697
        %v1114 = vmax.f32 %v600, %v698
        %v1115 = vmax.f32 %v601, %v699
        %v1116 = vmax.f32 %v602, %v700
        %v1117 = vmax.f32 %v603, %v701
        %v1118 = vmax.f32 %v604, %v702
        %v1119 = vmax.f32 %v605, %v703
        %v1120 = vmin.f32 %v1088, 0.0
        %v1121 = vmin.f32 %v1089, 0.0
        %v1122 = vmin.f32 %v1090, 0.0
        %v1123 = vmin.f32 %v1091, 0.0
        %v1124 = vmin.f32 %v1092, 0.0
        %v1125 = vmin.f32 %v1093, 0.0
        %v1126 = vmin.f32 %v1094, 0.0
        %v1127 = vmin.f32 %v1095, 0.0
        %v1128 = vmin.f32 %v1096, 0.0
        %v1129 = vmin.f32 %v1097, 0.0
        %v1130 = vmin.f32 %v1098, 0.0
        %v1131 = vmin.f32 %v1099, 0.0
        %v1132 = vmin.f32 %v1100, 0.0
        %v1133 = vmin.f32 %v1101, 0.0
        %v1134 = vmin.f32 %v1102, 0.0
        %v1135 = vmin.f32 %v1103, 0.0
        %v1136 = vmin.f32 %v1104, 0.0
        %v1137 = vmin.f32 %v1105, 0.0
        %v1138 = vmin.f32 %v1106, 0.0
        %v1139 = vmin.f32 %v1107, 0.0
        %v1140 = vmin.f32 %v1108, 0.0
        %v1141 = vmin.f32 %v1109, 0.0
        %v1142 = vmin.f32 %v1110, 0.0
        %v1143 = vmin.f32 %v1111, 0.0
        %v1144 = vmin.f32 %v1112, 0.0
        %v1145 = vmin.f32 %v1113, 0.0
        %v1146 = vmin.f32 %v1114, 0.0
        %v1147 = vmin.f32 %v1115, 0.0
        %v1148 = vmin.f32 %v1116, 0.0
        %v1149 = vmin.f32 %v1117, 0.0
        %v1150 = vmin.f32 %v1118, 0.0
        %v1151 = vmin.f32 %v1119, 0.0
        %v1152 = vadd.f32 %v870, %v1120
        %v1153 = vadd.f32 %v877, %v1121
        %v1154 = vadd.f32 %v884, %v1122
        %v1155 = vadd.f32 %v891, %v1123
        %v1156 = vadd.f32 %v898, %v1124
        %v1157 = vadd.f32 %v905, %v1125
        %v1158 = vadd.f32 %v912, %v1126
        %v1159 = vadd.f32 %v919, %v1127
        %v1160 = vadd.f32 %v926, %v1128
        %v1161 = vadd.f32 %v933, %v1129
        %v1162 = vadd.f32 %v940, %v1130
        %v1163 = vadd.f32 %v947, %v1131
        %v1164 = vadd.f32 %v954, %v1132
        %v1165 = vadd.f32 %v961, %v1133
        %v1166 = vadd.f32 %v968, %v1134
        %v1167 = vadd.f32 %v975, %v1135
        %v1168 = vadd.f32 %v982, %v1136
        %v1169 = vadd.f32 %v989, %v1137
        %v1170 = vadd.f32 %v996, %v1138
        %v1171 = vadd.f32 %v1003, %v1139
        %v1172 = vadd.f32 %v1010, %v1140
        %v1173 = vadd.f32 %v1017, %v1141
        %v1174 = vadd.f32 %v1024, %v1142
        %v1175 = vadd.f32 %v1031, %v1143
        %v1176 = vadd.f32 %v1038, %v1144
        %v1177 = vadd.f32 %v1045, %v1145
        %v1178 = vadd.f32 %v1052, %v1146
        %v1179 = vadd.f32 %v1059, %v1147
        %v1180 = vadd.f32 %v1066, %v1148
        %v1181 = vadd.f32 %v1073, %v1149
        %v1182 = vadd.f32 %v1080, %v1150
        %v1183 = vadd.f32 %v1087, %v1151
        %s1184 = sld [smem:[#allocation2 + $0x6]]
        %s1185 = sld [smem:[#allocation2 + $0x7]]
        %s1186 = sld [smem:[#allocation2 + $0x8]]
        %s1187 = sld [smem:[#allocation2 + $0x9]]
        %s1188 = sld [smem:[#allocation2 + $0xa]]
        %s1189 = sld [smem:[#allocation2 + $0xb]]
        %v1190 = vstv %s1184
        %v1191 = vmul.f32 %v1190, %v244
        %v1192 = vmul.f32 %v1190, %v245
        %v1193 = vmul.f32 %v1190, %v246
        %v1194 = vmul.f32 %v1190, %v247
        %v1195 = vmul.f32 %v1190, %v248
        %v1196 = vmul.f32 %v1190, %v249
        %v1197 = vmul.f32 %v1190, %v250
        %v1198 = vmul.f32 %v1190, %v251
        %v1199 = vmul.f32 %v1190, %v252
        %v1200 = vmul.f32 %v1190, %v253
        %v1201 = vmul.f32 %v1190, %v254
        %v1202 = vmul.f32 %v1190, %v255
        %v1203 = vmul.f32 %v1190, %v256
        %v1204 = vmul.f32 %v1190, %v257
        %v1205 = vmul.f32 %v1190, %v258
        %v1206 = vmul.f32 %v1190, %v259
        %v1207 = vmul.f32 %v1190, %v260
        %v1208 = vmul.f32 %v1190, %v261
        %v1209 = vmul.f32 %v1190, %v262
        %v1210 = vmul.f32 %v1190, %v263
        %v1211 = vmul.f32 %v1190, %v264
        %v1212 = vmul.f32 %v1190, %v265
        %v1213 = vmul.f32 %v1190, %v266
        %v1214 = vmul.f32 %v1190, %v267
        %v1215 = vmul.f32 %v1190, %v268
        %v1216 = vmul.f32 %v1190, %v269
        %v1217 = vmul.f32 %v1190, %v270
        %v1218 = vmul.f32 %v1190, %v271
        %v1219 = vmul.f32 %v1190, %v272
        %v1220 = vmul.f32 %v1190, %v273
        %v1221 = vmul.f32 %v1190, %v274
        %v1222 = vmul.f32 %v1190, %v275
        %v1223 = vstv %s1185
        %v1224 = vmul.f32 %v1223, %v276
        %v1225 = vmul.f32 %v1223, %v277
        %v1226 = vmul.f32 %v1223, %v278
        %v1227 = vmul.f32 %v1223, %v279
        %v1228 = vmul.f32 %v1223, %v280
        %v1229 = vmul.f32 %v1223, %v281
        %v1230 = vmul.f32 %v1223, %v282
        %v1231 = vmul.f32 %v1223, %v283
        %v1232 = vmul.f32 %v1223, %v284
        %v1233 = vmul.f32 %v1223, %v285
        %v1234 = vmul.f32 %v1223, %v286
        %v1235 = vmul.f32 %v1223, %v287
        %v1236 = vmul.f32 %v1223, %v288
        %v1237 = vmul.f32 %v1223, %v289
        %v1238 = vmul.f32 %v1223, %v290
        %v1239 = vmul.f32 %v1223, %v291
        %v1240 = vmul.f32 %v1223, %v292
        %v1241 = vmul.f32 %v1223, %v293
        %v1242 = vmul.f32 %v1223, %v294
        %v1243 = vmul.f32 %v1223, %v295
        %v1244 = vmul.f32 %v1223, %v296
        %v1245 = vmul.f32 %v1223, %v297
        %v1246 = vmul.f32 %v1223, %v298
        %v1247 = vmul.f32 %v1223, %v299
        %v1248 = vmul.f32 %v1223, %v300
        %v1249 = vmul.f32 %v1223, %v301
        %v1250 = vmul.f32 %v1223, %v302
        %v1251 = vmul.f32 %v1223, %v303
        %v1252 = vmul.f32 %v1223, %v304
        %v1253 = vmul.f32 %v1223, %v305
        %v1254 = vmul.f32 %v1223, %v306
        %v1255 = vmul.f32 %v1223, %v307
        %v1256 = vadd.f32 %v1191, %v1224
        %v1257 = vadd.f32 %v1192, %v1225
        %v1258 = vadd.f32 %v1193, %v1226
        %v1259 = vadd.f32 %v1194, %v1227
        %v1260 = vadd.f32 %v1195, %v1228
        %v1261 = vadd.f32 %v1196, %v1229
        %v1262 = vadd.f32 %v1197, %v1230
        %v1263 = vadd.f32 %v1198, %v1231
        %v1264 = vadd.f32 %v1199, %v1232
        %v1265 = vadd.f32 %v1200, %v1233
        %v1266 = vadd.f32 %v1201, %v1234
        %v1267 = vadd.f32 %v1202, %v1235
        %v1268 = vadd.f32 %v1203, %v1236
        %v1269 = vadd.f32 %v1204, %v1237
        %v1270 = vadd.f32 %v1205, %v1238
        %v1271 = vadd.f32 %v1206, %v1239
        %v1272 = vadd.f32 %v1207, %v1240
        %v1273 = vadd.f32 %v1208, %v1241
        %v1274 = vadd.f32 %v1209, %v1242
        %v1275 = vadd.f32 %v1210, %v1243
        %v1276 = vadd.f32 %v1211, %v1244
        %v1277 = vadd.f32 %v1212, %v1245
        %v1278 = vadd.f32 %v1213, %v1246
        %v1279 = vadd.f32 %v1214, %v1247
        %v1280 = vadd.f32 %v1215, %v1248
        %v1281 = vadd.f32 %v1216, %v1249
        %v1282 = vadd.f32 %v1217, %v1250
        %v1283 = vadd.f32 %v1218, %v1251
        %v1284 = vadd.f32 %v1219, %v1252
        %v1285 = vadd.f32 %v1220, %v1253
        %v1286 = vadd.f32 %v1221, %v1254
        %v1287 = vadd.f32 %v1222, %v1255
        %v1288 = vmul.f32 %v1190, %v276
        %v1289 = vmul.f32 %v1190, %v277
        %v1290 = vmul.f32 %v1190, %v278
        %v1291 = vmul.f32 %v1190, %v279
        %v1292 = vmul.f32 %v1190, %v280
        %v1293 = vmul.f32 %v1190, %v281
        %v1294 = vmul.f32 %v1190, %v282
        %v1295 = vmul.f32 %v1190, %v283
        %v1296 = vmul.f32 %v1190, %v284
        %v1297 = vmul.f32 %v1190, %v285
        %v1298 = vmul.f32 %v1190, %v286
        %v1299 = vmul.f32 %v1190, %v287
        %v1300 = vmul.f32 %v1190, %v288
        %v1301 = vmul.f32 %v1190, %v289
        %v1302 = vmul.f32 %v1190, %v290
        %v1303 = vmul.f32 %v1190, %v291
        %v1304 = vmul.f32 %v1190, %v292
        %v1305 = vmul.f32 %v1190, %v293
        %v1306 = vmul.f32 %v1190, %v294
        %v1307 = vmul.f32 %v1190, %v295
        %v1308 = vmul.f32 %v1190, %v296
        %v1309 = vmul.f32 %v1190, %v297
        %v1310 = vmul.f32 %v1190, %v298
        %v1311 = vmul.f32 %v1190, %v299
        %v1312 = vmul.f32 %v1190, %v300
        %v1313 = vmul.f32 %v1190, %v301
        %v1314 = vmul.f32 %v1190, %v302
        %v1315 = vmul.f32 %v1190, %v303
        %v1316 = vmul.f32 %v1190, %v304
        %v1317 = vmul.f32 %v1190, %v305
        %v1318 = vmul.f32 %v1190, %v306
        %v1319 = vmul.f32 %v1190, %v307
        %v1320 = vmul.f32 %v1223, %v244
        %v1321 = vmul.f32 %v1223, %v245
        %v1322 = vmul.f32 %v1223, %v246
        %v1323 = vmul.f32 %v1223, %v247
        %v1324 = vmul.f32 %v1223, %v248
        %v1325 = vmul.f32 %v1223, %v249
        %v1326 = vmul.f32 %v1223, %v250
        %v1327 = vmul.f32 %v1223, %v251
        %v1328 = vmul.f32 %v1223, %v252
        %v1329 = vmul.f32 %v1223, %v253
        %v1330 = vmul.f32 %v1223, %v254
        %v1331 = vmul.f32 %v1223, %v255
        %v1332 = vmul.f32 %v1223, %v256
        %v1333 = vmul.f32 %v1223, %v257
        %v1334 = vmul.f32 %v1223, %v258
        %v1335 = vmul.f32 %v1223, %v259
        %v1336 = vmul.f32 %v1223, %v260
        %v1337 = vmul.f32 %v1223, %v261
        %v1338 = vmul.f32 %v1223, %v262
        %v1339 = vmul.f32 %v1223, %v263
        %v1340 = vmul.f32 %v1223, %v264
        %v1341 = vmul.f32 %v1223, %v265
        %v1342 = vmul.f32 %v1223, %v266
        %v1343 = vmul.f32 %v1223, %v267
        %v1344 = vmul.f32 %v1223, %v268
        %v1345 = vmul.f32 %v1223, %v269
        %v1346 = vmul.f32 %v1223, %v270
        %v1347 = vmul.f32 %v1223, %v271
        %v1348 = vmul.f32 %v1223, %v272
        %v1349 = vmul.f32 %v1223, %v273
        %v1350 = vmul.f32 %v1223, %v274
        %v1351 = vmul.f32 %v1223, %v275
        %v1352 = vsub.f32 %v1288, %v1320
        %v1353 = vsub.f32 %v1289, %v1321
        %v1354 = vsub.f32 %v1290, %v1322
        %v1355 = vsub.f32 %v1291, %v1323
        %v1356 = vsub.f32 %v1292, %v1324
        %v1357 = vsub.f32 %v1293, %v1325
        %v1358 = vsub.f32 %v1294, %v1326
        %v1359 = vsub.f32 %v1295, %v1327
        %v1360 = vsub.f32 %v1296, %v1328
        %v1361 = vsub.f32 %v1297, %v1329
        %v1362 = vsub.f32 %v1298, %v1330
        %v1363 = vsub.f32 %v1299, %v1331
        %v1364 = vsub.f32 %v1300, %v1332
        %v1365 = vsub.f32 %v1301, %v1333
        %v1366 = vsub.f32 %v1302, %v1334
        %v1367 = vsub.f32 %v1303, %v1335
        %v1368 = vsub.f32 %v1304, %v1336
        %v1369 = vsub.f32 %v1305, %v1337
        %v1370 = vsub.f32 %v1306, %v1338
        %v1371 = vsub.f32 %v1307, %v1339
        %v1372 = vsub.f32 %v1308, %v1340
        %v1373 = vsub.f32 %v1309, %v1341
        %v1374 = vsub.f32 %v1310, %v1342
        %v1375 = vsub.f32 %v1311, %v1343
        %v1376 = vsub.f32 %v1312, %v1344
        %v1377 = vsub.f32 %v1313, %v1345
        %v1378 = vsub.f32 %v1314, %v1346
        %v1379 = vsub.f32 %v1315, %v1347
        %v1380 = vsub.f32 %v1316, %v1348
        %v1381 = vsub.f32 %v1317, %v1349
        %v1382 = vsub.f32 %v1318, %v1350
        %v1383 = vsub.f32 %v1319, %v1351
        %v1384 = vstv %s1186
        %v1385 = vsub.f32 %v1256, %v1384
        %v1386 = vsub.f32 %v1257, %v1384
        %v1387 = vsub.f32 %v1258, %v1384
        %v1388 = vsub.f32 %v1259, %v1384
        %v1389 = vsub.f32 %v1260, %v1384
        %v1390 = vsub.f32 %v1261, %v1384
        %v1391 = vsub.f32 %v1262, %v1384
        %v1392 = vsub.f32 %v1263, %v1384
        %v1393 = vsub.f32 %v1264, %v1384
        %v1394 = vsub.f32 %v1265, %v1384
        %v1395 = vsub.f32 %v1266, %v1384
        %v1396 = vsub.f32 %v1267, %v1384
        %v1397 = vsub.f32 %v1268, %v1384
        %v1398 = vsub.f32 %v1269, %v1384
        %v1399 = vsub.f32 %v1270, %v1384
        %v1400 = vsub.f32 %v1271, %v1384
        %v1401 = vsub.f32 %v1272, %v1384
        %v1402 = vsub.f32 %v1273, %v1384
        %v1403 = vsub.f32 %v1274, %v1384
        %v1404 = vsub.f32 %v1275, %v1384
        %v1405 = vsub.f32 %v1276, %v1384
        %v1406 = vsub.f32 %v1277, %v1384
        %v1407 = vsub.f32 %v1278, %v1384
        %v1408 = vsub.f32 %v1279, %v1384
        %v1409 = vsub.f32 %v1280, %v1384
        %v1410 = vsub.f32 %v1281, %v1384
        %v1411 = vsub.f32 %v1282, %v1384
        %v1412 = vsub.f32 %v1283, %v1384
        %v1413 = vsub.f32 %v1284, %v1384
        %v1414 = vsub.f32 %v1285, %v1384
        %v1415 = vsub.f32 %v1286, %v1384
        %v1416 = vsub.f32 %v1287, %v1384
        %v1417 = vand.u32 2147483647, %v1385
        %v1418 = vand.u32 2147483647, %v1386
        %v1419 = vand.u32 2147483647, %v1387
        %v1420 = vand.u32 2147483647, %v1388
        %v1421 = vand.u32 2147483647, %v1389
        %v1422 = vand.u32 2147483647, %v1390
        %v1423 = vand.u32 2147483647, %v1391
        %v1424 = vand.u32 2147483647, %v1392
        %v1425 = vand.u32 2147483647, %v1393
        %v1426 = vand.u32 2147483647, %v1394
        %v1427 = vand.u32 2147483647, %v1395
        %v1428 = vand.u32 2147483647, %v1396
        %v1429 = vand.u32 2147483647, %v1397
        %v1430 = vand.u32 2147483647, %v1398
        %v1431 = vand.u32 2147483647, %v1399
        %v1432 = vand.u32 2147483647, %v1400
        %v1433 = vand.u32 2147483647, %v1401
        %v1434 = vand.u32 2147483647, %v1402
        %v1435 = vand.u32 2147483647, %v1403
        %v1436 = vand.u32 2147483647, %v1404
        %v1437 = vand.u32 2147483647, %v1405
        %v1438 = vand.u32 2147483647, %v1406
        %v1439 = vand.u32 2147483647, %v1407
        %v1440 = vand.u32 2147483647, %v1408
        %v1441 = vand.u32 2147483647, %v1409
        %v1442 = vand.u32 2147483647, %v1410
        %v1443 = vand.u32 2147483647, %v1411
        %v1444 = vand.u32 2147483647, %v1412
        %v1445 = vand.u32 2147483647, %v1413
        %v1446 = vand.u32 2147483647, %v1414
        %v1447 = vand.u32 2147483647, %v1415
        %v1448 = vand.u32 2147483647, %v1416
        %v1449 = vstv %s1188
        %v1450 = vsub.f32 %v1417, %v1449
        %v1451 = vsub.f32 %v1418, %v1449
        %v1452 = vsub.f32 %v1419, %v1449
        %v1453 = vsub.f32 %v1420, %v1449
        %v1454 = vsub.f32 %v1421, %v1449
        %v1455 = vsub.f32 %v1422, %v1449
        %v1456 = vsub.f32 %v1423, %v1449
        %v1457 = vsub.f32 %v1424, %v1449
        %v1458 = vsub.f32 %v1425, %v1449
        %v1459 = vsub.f32 %v1426, %v1449
        %v1460 = vsub.f32 %v1427, %v1449
        %v1461 = vsub.f32 %v1428, %v1449
        %v1462 = vsub.f32 %v1429, %v1449
        %v1463 = vsub.f32 %v1430, %v1449
        %v1464 = vsub.f32 %v1431, %v1449
        %v1465 = vsub.f32 %v1432, %v1449
        %v1466 = vsub.f32 %v1433, %v1449
        %v1467 = vsub.f32 %v1434, %v1449
        %v1468 = vsub.f32 %v1435, %v1449
        %v1469 = vsub.f32 %v1436, %v1449
        %v1470 = vsub.f32 %v1437, %v1449
        %v1471 = vsub.f32 %v1438, %v1449
        %v1472 = vsub.f32 %v1439, %v1449
        %v1473 = vsub.f32 %v1440, %v1449
        %v1474 = vsub.f32 %v1441, %v1449
        %v1475 = vsub.f32 %v1442, %v1449
        %v1476 = vsub.f32 %v1443, %v1449
        %v1477 = vsub.f32 %v1444, %v1449
        %v1478 = vsub.f32 %v1445, %v1449
        %v1479 = vsub.f32 %v1446, %v1449
        %v1480 = vsub.f32 %v1447, %v1449
        %v1481 = vsub.f32 %v1448, %v1449
        %v1482 = vstv %s1187
        %v1483 = vsub.f32 %v1352, %v1482
        %v1484 = vsub.f32 %v1353, %v1482
        %v1485 = vsub.f32 %v1354, %v1482
        %v1486 = vsub.f32 %v1355, %v1482
        %v1487 = vsub.f32 %v1356, %v1482
        %v1488 = vsub.f32 %v1357, %v1482
        %v1489 = vsub.f32 %v1358, %v1482
        %v1490 = vsub.f32 %v1359, %v1482
        %v1491 = vsub.f32 %v1360, %v1482
        %v1492 = vsub.f32 %v1361, %v1482
        %v1493 = vsub.f32 %v1362, %v1482
        %v1494 = vsub.f32 %v1363, %v1482
        %v1495 = vsub.f32 %v1364, %v1482
        %v1496 = vsub.f32 %v1365, %v1482
        %v1497 = vsub.f32 %v1366, %v1482
        %v1498 = vsub.f32 %v1367, %v1482
        %v1499 = vsub.f32 %v1368, %v1482
        %v1500 = vsub.f32 %v1369, %v1482
        %v1501 = vsub.f32 %v1370, %v1482
        %v1502 = vsub.f32 %v1371, %v1482
        %v1503 = vsub.f32 %v1372, %v1482
        %v1504 = vsub.f32 %v1373, %v1482
        %v1505 = vsub.f32 %v1374, %v1482
        %v1506 = vsub.f32 %v1375, %v1482
        %v1507 = vsub.f32 %v1376, %v1482
        %v1508 = vsub.f32 %v1377, %v1482
        %v1509 = vsub.f32 %v1378, %v1482
        %v1510 = vsub.f32 %v1379, %v1482
        %v1511 = vsub.f32 %v1380, %v1482
        %v1512 = vsub.f32 %v1381, %v1482
        %v1513 = vsub.f32 %v1382, %v1482
        %v1514 = vsub.f32 %v1383, %v1482
        %v1515 = vand.u32 2147483647, %v1483
        %v1516 = vand.u32 2147483647, %v1484
        %v1517 = vand.u32 2147483647, %v1485
        %v1518 = vand.u32 2147483647, %v1486
        %v1519 = vand.u32 2147483647, %v1487
        %v1520 = vand.u32 2147483647, %v1488
        %v1521 = vand.u32 2147483647, %v1489
        %v1522 = vand.u32 2147483647, %v1490
        %v1523 = vand.u32 2147483647, %v1491
        %v1524 = vand.u32 2147483647, %v1492
        %v1525 = vand.u32 2147483647, %v1493
        %v1526 = vand.u32 2147483647, %v1494
        %v1527 = vand.u32 2147483647, %v1495
        %v1528 = vand.u32 2147483647, %v1496
        %v1529 = vand.u32 2147483647, %v1497
        %v1530 = vand.u32 2147483647, %v1498
        %v1531 = vand.u32 2147483647, %v1499
        %v1532 = vand.u32 2147483647, %v1500
        %v1533 = vand.u32 2147483647, %v1501
        %v1534 = vand.u32 2147483647, %v1502
        %v1535 = vand.u32 2147483647, %v1503
        %v1536 = vand.u32 2147483647, %v1504
        %v1537 = vand.u32 2147483647, %v1505
        %v1538 = vand.u32 2147483647, %v1506
        %v1539 = vand.u32 2147483647, %v1507
        %v1540 = vand.u32 2147483647, %v1508
        %v1541 = vand.u32 2147483647, %v1509
        %v1542 = vand.u32 2147483647, %v1510
        %v1543 = vand.u32 2147483647, %v1511
        %v1544 = vand.u32 2147483647, %v1512
        %v1545 = vand.u32 2147483647, %v1513
        %v1546 = vand.u32 2147483647, %v1514
        %v1547 = vstv %s1189
        %v1548 = vsub.f32 %v1515, %v1547
        %v1549 = vsub.f32 %v1516, %v1547
        %v1550 = vsub.f32 %v1517, %v1547
        %v1551 = vsub.f32 %v1518, %v1547
        %v1552 = vsub.f32 %v1519, %v1547
        %v1553 = vsub.f32 %v1520, %v1547
        %v1554 = vsub.f32 %v1521, %v1547
        %v1555 = vsub.f32 %v1522, %v1547
        %v1556 = vsub.f32 %v1523, %v1547
        %v1557 = vsub.f32 %v1524, %v1547
        %v1558 = vsub.f32 %v1525, %v1547
        %v1559 = vsub.f32 %v1526, %v1547
        %v1560 = vsub.f32 %v1527, %v1547
        %v1561 = vsub.f32 %v1528, %v1547
        %v1562 = vsub.f32 %v1529, %v1547
        %v1563 = vsub.f32 %v1530, %v1547
        %v1564 = vsub.f32 %v1531, %v1547
        %v1565 = vsub.f32 %v1532, %v1547
        %v1566 = vsub.f32 %v1533, %v1547
        %v1567 = vsub.f32 %v1534, %v1547
        %v1568 = vsub.f32 %v1535, %v1547
        %v1569 = vsub.f32 %v1536, %v1547
        %v1570 = vsub.f32 %v1537, %v1547
        %v1571 = vsub.f32 %v1538, %v1547
        %v1572 = vsub.f32 %v1539, %v1547
        %v1573 = vsub.f32 %v1540, %v1547
        %v1574 = vsub.f32 %v1541, %v1547
        %v1575 = vsub.f32 %v1542, %v1547
        %v1576 = vsub.f32 %v1543, %v1547
        %v1577 = vsub.f32 %v1544, %v1547
        %v1578 = vsub.f32 %v1545, %v1547
        %v1579 = vsub.f32 %v1546, %v1547
        %v1580 = vmax.f32 %v1450, 0.0
        %v1581 = vmax.f32 %v1451, 0.0
        %v1582 = vmax.f32 %v1452, 0.0
        %v1583 = vmax.f32 %v1453, 0.0
        %v1584 = vmax.f32 %v1454, 0.0
        %v1585 = vmax.f32 %v1455, 0.0
        %v1586 = vmax.f32 %v1456, 0.0
        %v1587 = vmax.f32 %v1457, 0.0
        %v1588 = vmax.f32 %v1458, 0.0
        %v1589 = vmax.f32 %v1459, 0.0
        %v1590 = vmax.f32 %v1460, 0.0
        %v1591 = vmax.f32 %v1461, 0.0
        %v1592 = vmax.f32 %v1462, 0.0
        %v1593 = vmax.f32 %v1463, 0.0
        %v1594 = vmax.f32 %v1464, 0.0
        %v1595 = vmax.f32 %v1465, 0.0
        %v1596 = vmax.f32 %v1466, 0.0
        %v1597 = vmax.f32 %v1467, 0.0
        %v1598 = vmax.f32 %v1468, 0.0
        %v1599 = vmax.f32 %v1469, 0.0
        %v1600 = vmax.f32 %v1470, 0.0
        %v1601 = vmax.f32 %v1471, 0.0
        %v1602 = vmax.f32 %v1472, 0.0
        %v1603 = vmax.f32 %v1473, 0.0
        %v1604 = vmax.f32 %v1474, 0.0
        %v1605 = vmax.f32 %v1475, 0.0
        %v1606 = vmax.f32 %v1476, 0.0
        %v1607 = vmax.f32 %v1477, 0.0
        %v1608 = vmax.f32 %v1478, 0.0
        %v1609 = vmax.f32 %v1479, 0.0
        %v1610 = vmax.f32 %v1480, 0.0
        %v1611 = vmax.f32 %v1481, 0.0
        %v1612 = vmax.f32 %v1548, 0.0
        %v1613 = vmax.f32 %v1549, 0.0
        %v1614 = vmax.f32 %v1550, 0.0
        %v1615 = vmax.f32 %v1551, 0.0
        %v1616 = vmax.f32 %v1552, 0.0
        %v1617 = vmax.f32 %v1553, 0.0
        %v1618 = vmax.f32 %v1554, 0.0
        %v1619 = vmax.f32 %v1555, 0.0
        %v1620 = vmax.f32 %v1556, 0.0
        %v1621 = vmax.f32 %v1557, 0.0
        %v1622 = vmax.f32 %v1558, 0.0
        %v1623 = vmax.f32 %v1559, 0.0
        %v1624 = vmax.f32 %v1560, 0.0
        %v1625 = vmax.f32 %v1561, 0.0
        %v1626 = vmax.f32 %v1562, 0.0
        %v1627 = vmax.f32 %v1563, 0.0
        %v1628 = vmax.f32 %v1564, 0.0
        %v1629 = vmax.f32 %v1565, 0.0
        %v1630 = vmax.f32 %v1566, 0.0
        %v1631 = vmax.f32 %v1567, 0.0
        %v1632 = vmax.f32 %v1568, 0.0
        %v1633 = vmax.f32 %v1569, 0.0
        %v1634 = vmax.f32 %v1570, 0.0
        %v1635 = vmax.f32 %v1571, 0.0
        %v1636 = vmax.f32 %v1572, 0.0
        %v1637 = vmax.f32 %v1573, 0.0
        %v1638 = vmax.f32 %v1574, 0.0
        %v1639 = vmax.f32 %v1575, 0.0
        %v1640 = vmax.f32 %v1576, 0.0
        %v1641 = vmax.f32 %v1577, 0.0
        %v1642 = vmax.f32 %v1578, 0.0
        %v1643 = vmax.f32 %v1579, 0.0
        %v1644 = vmul.f32 %v1580, %v1580
        %v1645 = vmul.f32 %v1581, %v1581
        %v1646 = vmul.f32 %v1582, %v1582
        %v1647 = vmul.f32 %v1583, %v1583
        %v1648 = vmul.f32 %v1584, %v1584
        %v1649 = vmul.f32 %v1585, %v1585
        %v1650 = vmul.f32 %v1586, %v1586
        %v1651 = vmul.f32 %v1587, %v1587
        %v1652 = vmul.f32 %v1588, %v1588
        %v1653 = vmul.f32 %v1589, %v1589
        %v1654 = vmul.f32 %v1590, %v1590
        %v1655 = vmul.f32 %v1591, %v1591
        %v1656 = vmul.f32 %v1592, %v1592
        %v1657 = vmul.f32 %v1593, %v1593
        %v1658 = vmul.f32 %v1594, %v1594
        %v1659 = vmul.f32 %v1595, %v1595
        %v1660 = vmul.f32 %v1596, %v1596
        %v1661 = vmul.f32 %v1597, %v1597
        %v1662 = vmul.f32 %v1598, %v1598
        %v1663 = vmul.f32 %v1599, %v1599
        %v1664 = vmul.f32 %v1600, %v1600
        %v1665 = vmul.f32 %v1601, %v1601
        %v1666 = vmul.f32 %v1602, %v1602
        %v1667 = vmul.f32 %v1603, %v1603
        %v1668 = vmul.f32 %v1604, %v1604
        %v1669 = vmul.f32 %v1605, %v1605
        %v1670 = vmul.f32 %v1606, %v1606
        %v1671 = vmul.f32 %v1607, %v1607
        %v1672 = vmul.f32 %v1608, %v1608
        %v1673 = vmul.f32 %v1609, %v1609
        %v1674 = vmul.f32 %v1610, %v1610
        %v1675 = vmul.f32 %v1611, %v1611
        %v1676 = vmul.f32 %v1612, %v1612
        %v1677 = vmul.f32 %v1613, %v1613
        %v1678 = vmul.f32 %v1614, %v1614
        %v1679 = vmul.f32 %v1615, %v1615
        %v1680 = vmul.f32 %v1616, %v1616
        %v1681 = vmul.f32 %v1617, %v1617
        %v1682 = vmul.f32 %v1618, %v1618
        %v1683 = vmul.f32 %v1619, %v1619
        %v1684 = vmul.f32 %v1620, %v1620
        %v1685 = vmul.f32 %v1621, %v1621
        %v1686 = vmul.f32 %v1622, %v1622
        %v1687 = vmul.f32 %v1623, %v1623
        %v1688 = vmul.f32 %v1624, %v1624
        %v1689 = vmul.f32 %v1625, %v1625
        %v1690 = vmul.f32 %v1626, %v1626
        %v1691 = vmul.f32 %v1627, %v1627
        %v1692 = vmul.f32 %v1628, %v1628
        %v1693 = vmul.f32 %v1629, %v1629
        %v1694 = vmul.f32 %v1630, %v1630
        %v1695 = vmul.f32 %v1631, %v1631
        %v1696 = vmul.f32 %v1632, %v1632
        %v1697 = vmul.f32 %v1633, %v1633
        %v1698 = vmul.f32 %v1634, %v1634
        %v1699 = vmul.f32 %v1635, %v1635
        %v1700 = vmul.f32 %v1636, %v1636
        %v1701 = vmul.f32 %v1637, %v1637
        %v1702 = vmul.f32 %v1638, %v1638
        %v1703 = vmul.f32 %v1639, %v1639
        %v1704 = vmul.f32 %v1640, %v1640
        %v1705 = vmul.f32 %v1641, %v1641
        %v1706 = vmul.f32 %v1642, %v1642
        %v1707 = vmul.f32 %v1643, %v1643
        %v1708 = vadd.f32 %v1644, %v1676
        %v1709 = vadd.f32 %v1645, %v1677
        %v1710 = vadd.f32 %v1646, %v1678
        %v1711 = vadd.f32 %v1647, %v1679
        %v1712 = vadd.f32 %v1648, %v1680
        %v1713 = vadd.f32 %v1649, %v1681
        %v1714 = vadd.f32 %v1650, %v1682
        %v1715 = vadd.f32 %v1651, %v1683
        %v1716 = vadd.f32 %v1652, %v1684
        %v1717 = vadd.f32 %v1653, %v1685
        %v1718 = vadd.f32 %v1654, %v1686
        %v1719 = vadd.f32 %v1655, %v1687
        %v1720 = vadd.f32 %v1656, %v1688
        %v1721 = vadd.f32 %v1657, %v1689
        %v1722 = vadd.f32 %v1658, %v1690
        %v1723 = vadd.f32 %v1659, %v1691
        %v1724 = vadd.f32 %v1660, %v1692
        %v1725 = vadd.f32 %v1661, %v1693
        %v1726 = vadd.f32 %v1662, %v1694
        %v1727 = vadd.f32 %v1663, %v1695
        %v1728 = vadd.f32 %v1664, %v1696
        %v1729 = vadd.f32 %v1665, %v1697
        %v1730 = vadd.f32 %v1666, %v1698
        %v1731 = vadd.f32 %v1667, %v1699
        %v1732 = vadd.f32 %v1668, %v1700
        %v1733 = vadd.f32 %v1669, %v1701
        %v1734 = vadd.f32 %v1670, %v1702
        %v1735 = vadd.f32 %v1671, %v1703
        %v1736 = vadd.f32 %v1672, %v1704
        %v1737 = vadd.f32 %v1673, %v1705
        %v1738 = vadd.f32 %v1674, %v1706
        %v1739 = vadd.f32 %v1675, %v1707
        %v1740 = vrsqrt.pop %v1708
        %v1741 = vmul.f32 %v1708, %v1740
        %vm1742 = vcmp.eq.f32.partialorder %v1708, inf
        %v1743 = vsel %vm1742, %v1708, %v1741
        %vm1744 = vcmp.eq.f32.partialorder %v1708, 0.0
        %v1745 = vand.u32 %v1708, 2147483648
        %v1746 = vsel %vm1744, %v1745, %v1743
        %v1747 = vrsqrt.pop %v1709
        %v1748 = vmul.f32 %v1709, %v1747
        %vm1749 = vcmp.eq.f32.partialorder %v1709, inf
        %v1750 = vsel %vm1749, %v1709, %v1748
        %vm1751 = vcmp.eq.f32.partialorder %v1709, 0.0
        %v1752 = vand.u32 %v1709, 2147483648
        %v1753 = vsel %vm1751, %v1752, %v1750
        %v1754 = vrsqrt.pop %v1710
        %v1755 = vmul.f32 %v1710, %v1754
        %vm1756 = vcmp.eq.f32.partialorder %v1710, inf
        %v1757 = vsel %vm1756, %v1710, %v1755
        %vm1758 = vcmp.eq.f32.partialorder %v1710, 0.0
        %v1759 = vand.u32 %v1710, 2147483648
        %v1760 = vsel %vm1758, %v1759, %v1757
        %v1761 = vrsqrt.pop %v1711
        %v1762 = vmul.f32 %v1711, %v1761
        %vm1763 = vcmp.eq.f32.partialorder %v1711, inf
        %v1764 = vsel %vm1763, %v1711, %v1762
        %vm1765 = vcmp.eq.f32.partialorder %v1711, 0.0
        %v1766 = vand.u32 %v1711, 2147483648
        %v1767 = vsel %vm1765, %v1766, %v1764
        %v1768 = vrsqrt.pop %v1712
        %v1769 = vmul.f32 %v1712, %v1768
        %vm1770 = vcmp.eq.f32.partialorder %v1712, inf
        %v1771 = vsel %vm1770, %v1712, %v1769
        %vm1772 = vcmp.eq.f32.partialorder %v1712, 0.0
        %v1773 = vand.u32 %v1712, 2147483648
        %v1774 = vsel %vm1772, %v1773, %v1771
        %v1775 = vrsqrt.pop %v1713
        %v1776 = vmul.f32 %v1713, %v1775
        %vm1777 = vcmp.eq.f32.partialorder %v1713, inf
        %v1778 = vsel %vm1777, %v1713, %v1776
        %vm1779 = vcmp.eq.f32.partialorder %v1713, 0.0
        %v1780 = vand.u32 %v1713, 2147483648
        %v1781 = vsel %vm1779, %v1780, %v1778
        %v1782 = vrsqrt.pop %v1714
        %v1783 = vmul.f32 %v1714, %v1782
        %vm1784 = vcmp.eq.f32.partialorder %v1714, inf
        %v1785 = vsel %vm1784, %v1714, %v1783
        %vm1786 = vcmp.eq.f32.partialorder %v1714, 0.0
        %v1787 = vand.u32 %v1714, 2147483648
        %v1788 = vsel %vm1786, %v1787, %v1785
        %v1789 = vrsqrt.pop %v1715
        %v1790 = vmul.f32 %v1715, %v1789
        %vm1791 = vcmp.eq.f32.partialorder %v1715, inf
        %v1792 = vsel %vm1791, %v1715, %v1790
        %vm1793 = vcmp.eq.f32.partialorder %v1715, 0.0
        %v1794 = vand.u32 %v1715, 2147483648
        %v1795 = vsel %vm1793, %v1794, %v1792
        %v1796 = vrsqrt.pop %v1716
        %v1797 = vmul.f32 %v1716, %v1796
        %vm1798 = vcmp.eq.f32.partialorder %v1716, inf
        %v1799 = vsel %vm1798, %v1716, %v1797
        %vm1800 = vcmp.eq.f32.partialorder %v1716, 0.0
        %v1801 = vand.u32 %v1716, 2147483648
        %v1802 = vsel %vm1800, %v1801, %v1799
        %v1803 = vrsqrt.pop %v1717
        %v1804 = vmul.f32 %v1717, %v1803
        %vm1805 = vcmp.eq.f32.partialorder %v1717, inf
        %v1806 = vsel %vm1805, %v1717, %v1804
        %vm1807 = vcmp.eq.f32.partialorder %v1717, 0.0
        %v1808 = vand.u32 %v1717, 2147483648
        %v1809 = vsel %vm1807, %v1808, %v1806
        %v1810 = vrsqrt.pop %v1718
        %v1811 = vmul.f32 %v1718, %v1810
        %vm1812 = vcmp.eq.f32.partialorder %v1718, inf
        %v1813 = vsel %vm1812, %v1718, %v1811
        %vm1814 = vcmp.eq.f32.partialorder %v1718, 0.0
        %v1815 = vand.u32 %v1718, 2147483648
        %v1816 = vsel %vm1814, %v1815, %v1813
        %v1817 = vrsqrt.pop %v1719
        %v1818 = vmul.f32 %v1719, %v1817
        %vm1819 = vcmp.eq.f32.partialorder %v1719, inf
        %v1820 = vsel %vm1819, %v1719, %v1818
        %vm1821 = vcmp.eq.f32.partialorder %v1719, 0.0
        %v1822 = vand.u32 %v1719, 2147483648
        %v1823 = vsel %vm1821, %v1822, %v1820
        %v1824 = vrsqrt.pop %v1720
        %v1825 = vmul.f32 %v1720, %v1824
        %vm1826 = vcmp.eq.f32.partialorder %v1720, inf
        %v1827 = vsel %vm1826, %v1720, %v1825
        %vm1828 = vcmp.eq.f32.partialorder %v1720, 0.0
        %v1829 = vand.u32 %v1720, 2147483648
        %v1830 = vsel %vm1828, %v1829, %v1827
        %v1831 = vrsqrt.pop %v1721
        %v1832 = vmul.f32 %v1721, %v1831
        %vm1833 = vcmp.eq.f32.partialorder %v1721, inf
        %v1834 = vsel %vm1833, %v1721, %v1832
        %vm1835 = vcmp.eq.f32.partialorder %v1721, 0.0
        %v1836 = vand.u32 %v1721, 2147483648
        %v1837 = vsel %vm1835, %v1836, %v1834
        %v1838 = vrsqrt.pop %v1722
        %v1839 = vmul.f32 %v1722, %v1838
        %vm1840 = vcmp.eq.f32.partialorder %v1722, inf
        %v1841 = vsel %vm1840, %v1722, %v1839
        %vm1842 = vcmp.eq.f32.partialorder %v1722, 0.0
        %v1843 = vand.u32 %v1722, 2147483648
        %v1844 = vsel %vm1842, %v1843, %v1841
        %v1845 = vrsqrt.pop %v1723
        %v1846 = vmul.f32 %v1723, %v1845
        %vm1847 = vcmp.eq.f32.partialorder %v1723, inf
        %v1848 = vsel %vm1847, %v1723, %v1846
        %vm1849 = vcmp.eq.f32.partialorder %v1723, 0.0
        %v1850 = vand.u32 %v1723, 2147483648
        %v1851 = vsel %vm1849, %v1850, %v1848
        %v1852 = vrsqrt.pop %v1724
        %v1853 = vmul.f32 %v1724, %v1852
        %vm1854 = vcmp.eq.f32.partialorder %v1724, inf
        %v1855 = vsel %vm1854, %v1724, %v1853
        %vm1856 = vcmp.eq.f32.partialorder %v1724, 0.0
        %v1857 = vand.u32 %v1724, 2147483648
        %v1858 = vsel %vm1856, %v1857, %v1855
        %v1859 = vrsqrt.pop %v1725
        %v1860 = vmul.f32 %v1725, %v1859
        %vm1861 = vcmp.eq.f32.partialorder %v1725, inf
        %v1862 = vsel %vm1861, %v1725, %v1860
        %vm1863 = vcmp.eq.f32.partialorder %v1725, 0.0
        %v1864 = vand.u32 %v1725, 2147483648
        %v1865 = vsel %vm1863, %v1864, %v1862
        %v1866 = vrsqrt.pop %v1726
        %v1867 = vmul.f32 %v1726, %v1866
        %vm1868 = vcmp.eq.f32.partialorder %v1726, inf
        %v1869 = vsel %vm1868, %v1726, %v1867
        %vm1870 = vcmp.eq.f32.partialorder %v1726, 0.0
        %v1871 = vand.u32 %v1726, 2147483648
        %v1872 = vsel %vm1870, %v1871, %v1869
        %v1873 = vrsqrt.pop %v1727
        %v1874 = vmul.f32 %v1727, %v1873
        %vm1875 = vcmp.eq.f32.partialorder %v1727, inf
        %v1876 = vsel %vm1875, %v1727, %v1874
        %vm1877 = vcmp.eq.f32.partialorder %v1727, 0.0
        %v1878 = vand.u32 %v1727, 2147483648
        %v1879 = vsel %vm1877, %v1878, %v1876
        %v1880 = vrsqrt.pop %v1728
        %v1881 = vmul.f32 %v1728, %v1880
        %vm1882 = vcmp.eq.f32.partialorder %v1728, inf
        %v1883 = vsel %vm1882, %v1728, %v1881
        %vm1884 = vcmp.eq.f32.partialorder %v1728, 0.0
        %v1885 = vand.u32 %v1728, 2147483648
        %v1886 = vsel %vm1884, %v1885, %v1883
        %v1887 = vrsqrt.pop %v1729
        %v1888 = vmul.f32 %v1729, %v1887
        %vm1889 = vcmp.eq.f32.partialorder %v1729, inf
        %v1890 = vsel %vm1889, %v1729, %v1888
        %vm1891 = vcmp.eq.f32.partialorder %v1729, 0.0
        %v1892 = vand.u32 %v1729, 2147483648
        %v1893 = vsel %vm1891, %v1892, %v1890
        %v1894 = vrsqrt.pop %v1730
        %v1895 = vmul.f32 %v1730, %v1894
        %vm1896 = vcmp.eq.f32.partialorder %v1730, inf
        %v1897 = vsel %vm1896, %v1730, %v1895
        %vm1898 = vcmp.eq.f32.partialorder %v1730, 0.0
        %v1899 = vand.u32 %v1730, 2147483648
        %v1900 = vsel %vm1898, %v1899, %v1897
        %v1901 = vrsqrt.pop %v1731
        %v1902 = vmul.f32 %v1731, %v1901
        %vm1903 = vcmp.eq.f32.partialorder %v1731, inf
        %v1904 = vsel %vm1903, %v1731, %v1902
        %vm1905 = vcmp.eq.f32.partialorder %v1731, 0.0
        %v1906 = vand.u32 %v1731, 2147483648
        %v1907 = vsel %vm1905, %v1906, %v1904
        %v1908 = vrsqrt.pop %v1732
        %v1909 = vmul.f32 %v1732, %v1908
        %vm1910 = vcmp.eq.f32.partialorder %v1732, inf
        %v1911 = vsel %vm1910, %v1732, %v1909
        %vm1912 = vcmp.eq.f32.partialorder %v1732, 0.0
        %v1913 = vand.u32 %v1732, 2147483648
        %v1914 = vsel %vm1912, %v1913, %v1911
        %v1915 = vrsqrt.pop %v1733
        %v1916 = vmul.f32 %v1733, %v1915
        %vm1917 = vcmp.eq.f32.partialorder %v1733, inf
        %v1918 = vsel %vm1917, %v1733, %v1916
        %vm1919 = vcmp.eq.f32.partialorder %v1733, 0.0
        %v1920 = vand.u32 %v1733, 2147483648
        %v1921 = vsel %vm1919, %v1920, %v1918
        %v1922 = vrsqrt.pop %v1734
        %v1923 = vmul.f32 %v1734, %v1922
        %vm1924 = vcmp.eq.f32.partialorder %v1734, inf
        %v1925 = vsel %vm1924, %v1734, %v1923
        %vm1926 = vcmp.eq.f32.partialorder %v1734, 0.0
        %v1927 = vand.u32 %v1734, 2147483648
        %v1928 = vsel %vm1926, %v1927, %v1925
        %v1929 = vrsqrt.pop %v1735
        %v1930 = vmul.f32 %v1735, %v1929
        %vm1931 = vcmp.eq.f32.partialorder %v1735, inf
        %v1932 = vsel %vm1931, %v1735, %v1930
        %vm1933 = vcmp.eq.f32.partialorder %v1735, 0.0
        %v1934 = vand.u32 %v1735, 2147483648
        %v1935 = vsel %vm1933, %v1934, %v1932
        %v1936 = vrsqrt.pop %v1736
        %v1937 = vmul.f32 %v1736, %v1936
        %vm1938 = vcmp.eq.f32.partialorder %v1736, inf
        %v1939 = vsel %vm1938, %v1736, %v1937
        %vm1940 = vcmp.eq.f32.partialorder %v1736, 0.0
        %v1941 = vand.u32 %v1736, 2147483648
        %v1942 = vsel %vm1940, %v1941, %v1939
        %v1943 = vrsqrt.pop %v1737
        %v1944 = vmul.f32 %v1737, %v1943
        %vm1945 = vcmp.eq.f32.partialorder %v1737, inf
        %v1946 = vsel %vm1945, %v1737, %v1944
        %vm1947 = vcmp.eq.f32.partialorder %v1737, 0.0
        %v1948 = vand.u32 %v1737, 2147483648
        %v1949 = vsel %vm1947, %v1948, %v1946
        %v1950 = vrsqrt.pop %v1738
        %v1951 = vmul.f32 %v1738, %v1950
        %vm1952 = vcmp.eq.f32.partialorder %v1738, inf
        %v1953 = vsel %vm1952, %v1738, %v1951
        %vm1954 = vcmp.eq.f32.partialorder %v1738, 0.0
        %v1955 = vand.u32 %v1738, 2147483648
        %v1956 = vsel %vm1954, %v1955, %v1953
        %v1957 = vrsqrt.pop %v1739
        %v1958 = vmul.f32 %v1739, %v1957
        %vm1959 = vcmp.eq.f32.partialorder %v1739, inf
        %v1960 = vsel %vm1959, %v1739, %v1958
        %vm1961 = vcmp.eq.f32.partialorder %v1739, 0.0
        %v1962 = vand.u32 %v1739, 2147483648
        %v1963 = vsel %vm1961, %v1962, %v1960
        %v1964 = vmax.f32 %v1450, %v1548
        %v1965 = vmax.f32 %v1451, %v1549
        %v1966 = vmax.f32 %v1452, %v1550
        %v1967 = vmax.f32 %v1453, %v1551
        %v1968 = vmax.f32 %v1454, %v1552
        %v1969 = vmax.f32 %v1455, %v1553
        %v1970 = vmax.f32 %v1456, %v1554
        %v1971 = vmax.f32 %v1457, %v1555
        %v1972 = vmax.f32 %v1458, %v1556
        %v1973 = vmax.f32 %v1459, %v1557
        %v1974 = vmax.f32 %v1460, %v1558
        %v1975 = vmax.f32 %v1461, %v1559
        %v1976 = vmax.f32 %v1462, %v1560
        %v1977 = vmax.f32 %v1463, %v1561
        %v1978 = vmax.f32 %v1464, %v1562
        %v1979 = vmax.f32 %v1465, %v1563
        %v1980 = vmax.f32 %v1466, %v1564
        %v1981 = vmax.f32 %v1467, %v1565
        %v1982 = vmax.f32 %v1468, %v1566
        %v1983 = vmax.f32 %v1469, %v1567
        %v1984 = vmax.f32 %v1470, %v1568
        %v1985 = vmax.f32 %v1471, %v1569
        %v1986 = vmax.f32 %v1472, %v1570
        %v1987 = vmax.f32 %v1473, %v1571
        %v1988 = vmax.f32 %v1474, %v1572
        %v1989 = vmax.f32 %v1475, %v1573
        %v1990 = vmax.f32 %v1476, %v1574
        %v1991 = vmax.f32 %v1477, %v1575
        %v1992 = vmax.f32 %v1478, %v1576
        %v1993 = vmax.f32 %v1479, %v1577
        %v1994 = vmax.f32 %v1480, %v1578
        %v1995 = vmax.f32 %v1481, %v1579
        %v1996 = vmin.f32 %v1964, 0.0
        %v1997 = vmin.f32 %v1965, 0.0
        %v1998 = vmin.f32 %v1966, 0.0
        %v1999 = vmin.f32 %v1967, 0.0
        %v2000 = vmin.f32 %v1968, 0.0
        %v2001 = vmin.f32 %v1969, 0.0
        %v2002 = vmin.f32 %v1970, 0.0
        %v2003 = vmin.f32 %v1971, 0.0
        %v2004 = vmin.f32 %v1972, 0.0
        %v2005 = vmin.f32 %v1973, 0.0
        %v2006 = vmin.f32 %v1974, 0.0
        %v2007 = vmin.f32 %v1975, 0.0
        %v2008 = vmin.f32 %v1976, 0.0
        %v2009 = vmin.f32 %v1977, 0.0
        %v2010 = vmin.f32 %v1978, 0.0
        %v2011 = vmin.f32 %v1979, 0.0
        %v2012 = vmin.f32 %v1980, 0.0
        %v2013 = vmin.f32 %v1981, 0.0
        %v2014 = vmin.f32 %v1982, 0.0
        %v2015 = vmin.f32 %v1983, 0.0
        %v2016 = vmin.f32 %v1984, 0.0
        %v2017 = vmin.f32 %v1985, 0.0
        %v2018 = vmin.f32 %v1986, 0.0
        %v2019 = vmin.f32 %v1987, 0.0
        %v2020 = vmin.f32 %v1988, 0.0
        %v2021 = vmin.f32 %v1989, 0.0
        %v2022 = vmin.f32 %v1990, 0.0
        %v2023 = vmin.f32 %v1991, 0.0
        %v2024 = vmin.f32 %v1992, 0.0
        %v2025 = vmin.f32 %v1993, 0.0
        %v2026 = vmin.f32 %v1994, 0.0
        %v2027 = vmin.f32 %v1995, 0.0
        %v2028 = vadd.f32 %v1746, %v1996
        %v2029 = vadd.f32 %v1753, %v1997
        %v2030 = vadd.f32 %v1760, %v1998
        %v2031 = vadd.f32 %v1767, %v1999
        %v2032 = vadd.f32 %v1774, %v2000
        %v2033 = vadd.f32 %v1781, %v2001
        %v2034 = vadd.f32 %v1788, %v2002
        %v2035 = vadd.f32 %v1795, %v2003
        %v2036 = vadd.f32 %v1802, %v2004
        %v2037 = vadd.f32 %v1809, %v2005
        %v2038 = vadd.f32 %v1816, %v2006
        %v2039 = vadd.f32 %v1823, %v2007
        %v2040 = vadd.f32 %v1830, %v2008
        %v2041 = vadd.f32 %v1837, %v2009
        %v2042 = vadd.f32 %v1844, %v2010
        %v2043 = vadd.f32 %v1851, %v2011
        %v2044 = vadd.f32 %v1858, %v2012
        %v2045 = vadd.f32 %v1865, %v2013
        %v2046 = vadd.f32 %v1872, %v2014
        %v2047 = vadd.f32 %v1879, %v2015
        %v2048 = vadd.f32 %v1886, %v2016
        %v2049 = vadd.f32 %v1893, %v2017
        %v2050 = vadd.f32 %v1900, %v2018
        %v2051 = vadd.f32 %v1907, %v2019
        %v2052 = vadd.f32 %v1914, %v2020
        %v2053 = vadd.f32 %v1921, %v2021
        %v2054 = vadd.f32 %v1928, %v2022
        %v2055 = vadd.f32 %v1935, %v2023
        %v2056 = vadd.f32 %v1942, %v2024
        %v2057 = vadd.f32 %v1949, %v2025
        %v2058 = vadd.f32 %v1956, %v2026
        %v2059 = vadd.f32 %v1963, %v2027
        %v2060 = vmin.f32 %v1152, %v2028
        %v2061 = vmin.f32 %v1153, %v2029
        %v2062 = vmin.f32 %v1154, %v2030
        %v2063 = vmin.f32 %v1155, %v2031
        %v2064 = vmin.f32 %v1156, %v2032
        %v2065 = vmin.f32 %v1157, %v2033
        %v2066 = vmin.f32 %v1158, %v2034
        %v2067 = vmin.f32 %v1159, %v2035
        %v2068 = vmin.f32 %v1160, %v2036
        %v2069 = vmin.f32 %v1161, %v2037
        %v2070 = vmin.f32 %v1162, %v2038
        %v2071 = vmin.f32 %v1163, %v2039
        %v2072 = vmin.f32 %v1164, %v2040
        %v2073 = vmin.f32 %v1165, %v2041
        %v2074 = vmin.f32 %v1166, %v2042
        %v2075 = vmin.f32 %v1167, %v2043
        %v2076 = vmin.f32 %v1168, %v2044
        %v2077 = vmin.f32 %v1169, %v2045
        %v2078 = vmin.f32 %v1170, %v2046
        %v2079 = vmin.f32 %v1171, %v2047
        %v2080 = vmin.f32 %v1172, %v2048
        %v2081 = vmin.f32 %v1173, %v2049
        %v2082 = vmin.f32 %v1174, %v2050
        %v2083 = vmin.f32 %v1175, %v2051
        %v2084 = vmin.f32 %v1176, %v2052
        %v2085 = vmin.f32 %v1177, %v2053
        %v2086 = vmin.f32 %v1178, %v2054
        %v2087 = vmin.f32 %v1179, %v2055
        %v2088 = vmin.f32 %v1180, %v2056
        %v2089 = vmin.f32 %v1181, %v2057
        %v2090 = vmin.f32 %v1182, %v2058
        %v2091 = vmin.f32 %v1183, %v2059
        %s2092 = sld [smem:[#allocation2 + $0xc]]
        %s2093 = sld [smem:[#allocation2 + $0xd]]
        %s2094 = sld [smem:[#allocation2 + $0xe]]
        %s2095 = sld [smem:[#allocation2 + $0xf]]
        %s2096 = sld [smem:[#allocation2 + $0x10]]
        %s2097 = sld [smem:[#allocation2 + $0x11]]
        %v2098 = vstv %s2092
        %v2099 = vmul.f32 %v2098, %v244
        %v2100 = vmul.f32 %v2098, %v245
        %v2101 = vmul.f32 %v2098, %v246
        %v2102 = vmul.f32 %v2098, %v247
        %v2103 = vmul.f32 %v2098, %v248
        %v2104 = vmul.f32 %v2098, %v249
        %v2105 = vmul.f32 %v2098, %v250
        %v2106 = vmul.f32 %v2098, %v251
        %v2107 = vmul.f32 %v2098, %v252
        %v2108 = vmul.f32 %v2098, %v253
        %v2109 = vmul.f32 %v2098, %v254
        %v2110 = vmul.f32 %v2098, %v255
        %v2111 = vmul.f32 %v2098, %v256
        %v2112 = vmul.f32 %v2098, %v257
        %v2113 = vmul.f32 %v2098, %v258
        %v2114 = vmul.f32 %v2098, %v259
        %v2115 = vmul.f32 %v2098, %v260
        %v2116 = vmul.f32 %v2098, %v261
        %v2117 = vmul.f32 %v2098, %v262
        %v2118 = vmul.f32 %v2098, %v263
        %v2119 = vmul.f32 %v2098, %v264
        %v2120 = vmul.f32 %v2098, %v265
        %v2121 = vmul.f32 %v2098, %v266
        %v2122 = vmul.f32 %v2098, %v267
        %v2123 = vmul.f32 %v2098, %v268
        %v2124 = vmul.f32 %v2098, %v269
        %v2125 = vmul.f32 %v2098, %v270
        %v2126 = vmul.f32 %v2098, %v271
        %v2127 = vmul.f32 %v2098, %v272
        %v2128 = vmul.f32 %v2098, %v273
        %v2129 = vmul.f32 %v2098, %v274
        %v2130 = vmul.f32 %v2098, %v275
        %v2131 = vstv %s2093
        %v2132 = vmul.f32 %v2131, %v276
        %v2133 = vmul.f32 %v2131, %v277
        %v2134 = vmul.f32 %v2131, %v278
        %v2135 = vmul.f32 %v2131, %v279
        %v2136 = vmul.f32 %v2131, %v280
        %v2137 = vmul.f32 %v2131, %v281
        %v2138 = vmul.f32 %v2131, %v282
        %v2139 = vmul.f32 %v2131, %v283
        %v2140 = vmul.f32 %v2131, %v284
        %v2141 = vmul.f32 %v2131, %v285
        %v2142 = vmul.f32 %v2131, %v286
        %v2143 = vmul.f32 %v2131, %v287
        %v2144 = vmul.f32 %v2131, %v288
        %v2145 = vmul.f32 %v2131, %v289
        %v2146 = vmul.f32 %v2131, %v290
        %v2147 = vmul.f32 %v2131, %v291
        %v2148 = vmul.f32 %v2131, %v292
        %v2149 = vmul.f32 %v2131, %v293
        %v2150 = vmul.f32 %v2131, %v294
        %v2151 = vmul.f32 %v2131, %v295
        %v2152 = vmul.f32 %v2131, %v296
        %v2153 = vmul.f32 %v2131, %v297
        %v2154 = vmul.f32 %v2131, %v298
        %v2155 = vmul.f32 %v2131, %v299
        %v2156 = vmul.f32 %v2131, %v300
        %v2157 = vmul.f32 %v2131, %v301
        %v2158 = vmul.f32 %v2131, %v302
        %v2159 = vmul.f32 %v2131, %v303
        %v2160 = vmul.f32 %v2131, %v304
        %v2161 = vmul.f32 %v2131, %v305
        %v2162 = vmul.f32 %v2131, %v306
        %v2163 = vmul.f32 %v2131, %v307
        %v2164 = vadd.f32 %v2099, %v2132
        %v2165 = vadd.f32 %v2100, %v2133
        %v2166 = vadd.f32 %v2101, %v2134
        %v2167 = vadd.f32 %v2102, %v2135
        %v2168 = vadd.f32 %v2103, %v2136
        %v2169 = vadd.f32 %v2104, %v2137
        %v2170 = vadd.f32 %v2105, %v2138
        %v2171 = vadd.f32 %v2106, %v2139
        %v2172 = vadd.f32 %v2107, %v2140
        %v2173 = vadd.f32 %v2108, %v2141
        %v2174 = vadd.f32 %v2109, %v2142
        %v2175 = vadd.f32 %v2110, %v2143
        %v2176 = vadd.f32 %v2111, %v2144
        %v2177 = vadd.f32 %v2112, %v2145
        %v2178 = vadd.f32 %v2113, %v2146
        %v2179 = vadd.f32 %v2114, %v2147
        %v2180 = vadd.f32 %v2115, %v2148
        %v2181 = vadd.f32 %v2116, %v2149
        %v2182 = vadd.f32 %v2117, %v2150
        %v2183 = vadd.f32 %v2118, %v2151
        %v2184 = vadd.f32 %v2119, %v2152
        %v2185 = vadd.f32 %v2120, %v2153
        %v2186 = vadd.f32 %v2121, %v2154
        %v2187 = vadd.f32 %v2122, %v2155
        %v2188 = vadd.f32 %v2123, %v2156
        %v2189 = vadd.f32 %v2124, %v2157
        %v2190 = vadd.f32 %v2125, %v2158
        %v2191 = vadd.f32 %v2126, %v2159
        %v2192 = vadd.f32 %v2127, %v2160
        %v2193 = vadd.f32 %v2128, %v2161
        %v2194 = vadd.f32 %v2129, %v2162
        %v2195 = vadd.f32 %v2130, %v2163
        %v2196 = vmul.f32 %v2098, %v276
        %v2197 = vmul.f32 %v2098, %v277
        %v2198 = vmul.f32 %v2098, %v278
        %v2199 = vmul.f32 %v2098, %v279
        %v2200 = vmul.f32 %v2098, %v280
        %v2201 = vmul.f32 %v2098, %v281
        %v2202 = vmul.f32 %v2098, %v282
        %v2203 = vmul.f32 %v2098, %v283
        %v2204 = vmul.f32 %v2098, %v284
        %v2205 = vmul.f32 %v2098, %v285
        %v2206 = vmul.f32 %v2098, %v286
        %v2207 = vmul.f32 %v2098, %v287
        %v2208 = vmul.f32 %v2098, %v288
        %v2209 = vmul.f32 %v2098, %v289
        %v2210 = vmul.f32 %v2098, %v290
        %v2211 = vmul.f32 %v2098, %v291
        %v2212 = vmul.f32 %v2098, %v292
        %v2213 = vmul.f32 %v2098, %v293
        %v2214 = vmul.f32 %v2098, %v294
        %v2215 = vmul.f32 %v2098, %v295
        %v2216 = vmul.f32 %v2098, %v296
        %v2217 = vmul.f32 %v2098, %v297
        %v2218 = vmul.f32 %v2098, %v298
        %v2219 = vmul.f32 %v2098, %v299
        %v2220 = vmul.f32 %v2098, %v300
        %v2221 = vmul.f32 %v2098, %v301
        %v2222 = vmul.f32 %v2098, %v302
        %v2223 = vmul.f32 %v2098, %v303
        %v2224 = vmul.f32 %v2098, %v304
        %v2225 = vmul.f32 %v2098, %v305
        %v2226 = vmul.f32 %v2098, %v306
        %v2227 = vmul.f32 %v2098, %v307
        %v2228 = vmul.f32 %v2131, %v244
        %v2229 = vmul.f32 %v2131, %v245
        %v2230 = vmul.f32 %v2131, %v246
        %v2231 = vmul.f32 %v2131, %v247
        %v2232 = vmul.f32 %v2131, %v248
        %v2233 = vmul.f32 %v2131, %v249
        %v2234 = vmul.f32 %v2131, %v250
        %v2235 = vmul.f32 %v2131, %v251
        %v2236 = vmul.f32 %v2131, %v252
        %v2237 = vmul.f32 %v2131, %v253
        %v2238 = vmul.f32 %v2131, %v254
        %v2239 = vmul.f32 %v2131, %v255
        %v2240 = vmul.f32 %v2131, %v256
        %v2241 = vmul.f32 %v2131, %v257
        %v2242 = vmul.f32 %v2131, %v258
        %v2243 = vmul.f32 %v2131, %v259
        %v2244 = vmul.f32 %v2131, %v260
        %v2245 = vmul.f32 %v2131, %v261
        %v2246 = vmul.f32 %v2131, %v262
        %v2247 = vmul.f32 %v2131, %v263
        %v2248 = vmul.f32 %v2131, %v264
        %v2249 = vmul.f32 %v2131, %v265
        %v2250 = vmul.f32 %v2131, %v266
        %v2251 = vmul.f32 %v2131, %v267
        %v2252 = vmul.f32 %v2131, %v268
        %v2253 = vmul.f32 %v2131, %v269
        %v2254 = vmul.f32 %v2131, %v270
        %v2255 = vmul.f32 %v2131, %v271
        %v2256 = vmul.f32 %v2131, %v272
        %v2257 = vmul.f32 %v2131, %v273
        %v2258 = vmul.f32 %v2131, %v274
        %v2259 = vmul.f32 %v2131, %v275
        %v2260 = vsub.f32 %v2196, %v2228
        %v2261 = vsub.f32 %v2197, %v2229
        %v2262 = vsub.f32 %v2198, %v2230
        %v2263 = vsub.f32 %v2199, %v2231
        %v2264 = vsub.f32 %v2200, %v2232
        %v2265 = vsub.f32 %v2201, %v2233
        %v2266 = vsub.f32 %v2202, %v2234
        %v2267 = vsub.f32 %v2203, %v2235
        %v2268 = vsub.f32 %v2204, %v2236
        %v2269 = vsub.f32 %v2205, %v2237
        %v2270 = vsub.f32 %v2206, %v2238
        %v2271 = vsub.f32 %v2207, %v2239
        %v2272 = vsub.f32 %v2208, %v2240
        %v2273 = vsub.f32 %v2209, %v2241
        %v2274 = vsub.f32 %v2210, %v2242
        %v2275 = vsub.f32 %v2211, %v2243
        %v2276 = vsub.f32 %v2212, %v2244
        %v2277 = vsub.f32 %v2213, %v2245
        %v2278 = vsub.f32 %v2214, %v2246
        %v2279 = vsub.f32 %v2215, %v2247
        %v2280 = vsub.f32 %v2216, %v2248
        %v2281 = vsub.f32 %v2217, %v2249
        %v2282 = vsub.f32 %v2218, %v2250
        %v2283 = vsub.f32 %v2219, %v2251
        %v2284 = vsub.f32 %v2220, %v2252
        %v2285 = vsub.f32 %v2221, %v2253
        %v2286 = vsub.f32 %v2222, %v2254
        %v2287 = vsub.f32 %v2223, %v2255
        %v2288 = vsub.f32 %v2224, %v2256
        %v2289 = vsub.f32 %v2225, %v2257
        %v2290 = vsub.f32 %v2226, %v2258
        %v2291 = vsub.f32 %v2227, %v2259
        %v2292 = vstv %s2094
        %v2293 = vsub.f32 %v2164, %v2292
        %v2294 = vsub.f32 %v2165, %v2292
        %v2295 = vsub.f32 %v2166, %v2292
        %v2296 = vsub.f32 %v2167, %v2292
        %v2297 = vsub.f32 %v2168, %v2292
        %v2298 = vsub.f32 %v2169, %v2292
        %v2299 = vsub.f32 %v2170, %v2292
        %v2300 = vsub.f32 %v2171, %v2292
        %v2301 = vsub.f32 %v2172, %v2292
        %v2302 = vsub.f32 %v2173, %v2292
        %v2303 = vsub.f32 %v2174, %v2292
        %v2304 = vsub.f32 %v2175, %v2292
        %v2305 = vsub.f32 %v2176, %v2292
        %v2306 = vsub.f32 %v2177, %v2292
        %v2307 = vsub.f32 %v2178, %v2292
        %v2308 = vsub.f32 %v2179, %v2292
        %v2309 = vsub.f32 %v2180, %v2292
        %v2310 = vsub.f32 %v2181, %v2292
        %v2311 = vsub.f32 %v2182, %v2292
        %v2312 = vsub.f32 %v2183, %v2292
        %v2313 = vsub.f32 %v2184, %v2292
        %v2314 = vsub.f32 %v2185, %v2292
        %v2315 = vsub.f32 %v2186, %v2292
        %v2316 = vsub.f32 %v2187, %v2292
        %v2317 = vsub.f32 %v2188, %v2292
        %v2318 = vsub.f32 %v2189, %v2292
        %v2319 = vsub.f32 %v2190, %v2292
        %v2320 = vsub.f32 %v2191, %v2292
        %v2321 = vsub.f32 %v2192, %v2292
        %v2322 = vsub.f32 %v2193, %v2292
        %v2323 = vsub.f32 %v2194, %v2292
        %v2324 = vsub.f32 %v2195, %v2292
        %v2325 = vand.u32 2147483647, %v2293
        %v2326 = vand.u32 2147483647, %v2294
        %v2327 = vand.u32 2147483647, %v2295
        %v2328 = vand.u32 2147483647, %v2296
        %v2329 = vand.u32 2147483647, %v2297
        %v2330 = vand.u32 2147483647, %v2298
        %v2331 = vand.u32 2147483647, %v2299
        %v2332 = vand.u32 2147483647, %v2300
        %v2333 = vand.u32 2147483647, %v2301
        %v2334 = vand.u32 2147483647, %v2302
        %v2335 = vand.u32 2147483647, %v2303
        %v2336 = vand.u32 2147483647, %v2304
        %v2337 = vand.u32 2147483647, %v2305
        %v2338 = vand.u32 2147483647, %v2306
        %v2339 = vand.u32 2147483647, %v2307
        %v2340 = vand.u32 2147483647, %v2308
        %v2341 = vand.u32 2147483647, %v2309
        %v2342 = vand.u32 2147483647, %v2310
        %v2343 = vand.u32 2147483647, %v2311
        %v2344 = vand.u32 2147483647, %v2312
        %v2345 = vand.u32 2147483647, %v2313
        %v2346 = vand.u32 2147483647, %v2314
        %v2347 = vand.u32 2147483647, %v2315
        %v2348 = vand.u32 2147483647, %v2316
        %v2349 = vand.u32 2147483647, %v2317
        %v2350 = vand.u32 2147483647, %v2318
        %v2351 = vand.u32 2147483647, %v2319
        %v2352 = vand.u32 2147483647, %v2320
        %v2353 = vand.u32 2147483647, %v2321
        %v2354 = vand.u32 2147483647, %v2322
        %v2355 = vand.u32 2147483647, %v2323
        %v2356 = vand.u32 2147483647, %v2324
        %v2357 = vstv %s2096
        %v2358 = vsub.f32 %v2325, %v2357
        %v2359 = vsub.f32 %v2326, %v2357
        %v2360 = vsub.f32 %v2327, %v2357
        %v2361 = vsub.f32 %v2328, %v2357
        %v2362 = vsub.f32 %v2329, %v2357
        %v2363 = vsub.f32 %v2330, %v2357
        %v2364 = vsub.f32 %v2331, %v2357
        %v2365 = vsub.f32 %v2332, %v2357
        %v2366 = vsub.f32 %v2333, %v2357
        %v2367 = vsub.f32 %v2334, %v2357
        %v2368 = vsub.f32 %v2335, %v2357
        %v2369 = vsub.f32 %v2336, %v2357
        %v2370 = vsub.f32 %v2337, %v2357
        %v2371 = vsub.f32 %v2338, %v2357
        %v2372 = vsub.f32 %v2339, %v2357
        %v2373 = vsub.f32 %v2340, %v2357
        %v2374 = vsub.f32 %v2341, %v2357
        %v2375 = vsub.f32 %v2342, %v2357
        %v2376 = vsub.f32 %v2343, %v2357
        %v2377 = vsub.f32 %v2344, %v2357
        %v2378 = vsub.f32 %v2345, %v2357
        %v2379 = vsub.f32 %v2346, %v2357
        %v2380 = vsub.f32 %v2347, %v2357
        %v2381 = vsub.f32 %v2348, %v2357
        %v2382 = vsub.f32 %v2349, %v2357
        %v2383 = vsub.f32 %v2350, %v2357
        %v2384 = vsub.f32 %v2351, %v2357
        %v2385 = vsub.f32 %v2352, %v2357
        %v2386 = vsub.f32 %v2353, %v2357
        %v2387 = vsub.f32 %v2354, %v2357
        %v2388 = vsub.f32 %v2355, %v2357
        %v2389 = vsub.f32 %v2356, %v2357
        %v2390 = vstv %s2095
        %v2391 = vsub.f32 %v2260, %v2390
        %v2392 = vsub.f32 %v2261, %v2390
        %v2393 = vsub.f32 %v2262, %v2390
        %v2394 = vsub.f32 %v2263, %v2390
        %v2395 = vsub.f32 %v2264, %v2390
        %v2396 = vsub.f32 %v2265, %v2390
        %v2397 = vsub.f32 %v2266, %v2390
        %v2398 = vsub.f32 %v2267, %v2390
        %v2399 = vsub.f32 %v2268, %v2390
        %v2400 = vsub.f32 %v2269, %v2390
        %v2401 = vsub.f32 %v2270, %v2390
        %v2402 = vsub.f32 %v2271, %v2390
        %v2403 = vsub.f32 %v2272, %v2390
        %v2404 = vsub.f32 %v2273, %v2390
        %v2405 = vsub.f32 %v2274, %v2390
        %v2406 = vsub.f32 %v2275, %v2390
        %v2407 = vsub.f32 %v2276, %v2390
        %v2408 = vsub.f32 %v2277, %v2390
        %v2409 = vsub.f32 %v2278, %v2390
        %v2410 = vsub.f32 %v2279, %v2390
        %v2411 = vsub.f32 %v2280, %v2390
        %v2412 = vsub.f32 %v2281, %v2390
        %v2413 = vsub.f32 %v2282, %v2390
        %v2414 = vsub.f32 %v2283, %v2390
        %v2415 = vsub.f32 %v2284, %v2390
        %v2416 = vsub.f32 %v2285, %v2390
        %v2417 = vsub.f32 %v2286, %v2390
        %v2418 = vsub.f32 %v2287, %v2390
        %v2419 = vsub.f32 %v2288, %v2390
        %v2420 = vsub.f32 %v2289, %v2390
        %v2421 = vsub.f32 %v2290, %v2390
        %v2422 = vsub.f32 %v2291, %v2390
        %v2423 = vand.u32 2147483647, %v2391
        %v2424 = vand.u32 2147483647, %v2392
        %v2425 = vand.u32 2147483647, %v2393
        %v2426 = vand.u32 2147483647, %v2394
        %v2427 = vand.u32 2147483647, %v2395
        %v2428 = vand.u32 2147483647, %v2396
        %v2429 = vand.u32 2147483647, %v2397
        %v2430 = vand.u32 2147483647, %v2398
        %v2431 = vand.u32 2147483647, %v2399
        %v2432 = vand.u32 2147483647, %v2400
        %v2433 = vand.u32 2147483647, %v2401
        %v2434 = vand.u32 2147483647, %v2402
        %v2435 = vand.u32 2147483647, %v2403
        %v2436 = vand.u32 2147483647, %v2404
        %v2437 = vand.u32 2147483647, %v2405
        %v2438 = vand.u32 2147483647, %v2406
        %v2439 = vand.u32 2147483647, %v2407
        %v2440 = vand.u32 2147483647, %v2408
        %v2441 = vand.u32 2147483647, %v2409
        %v2442 = vand.u32 2147483647, %v2410
        %v2443 = vand.u32 2147483647, %v2411
        %v2444 = vand.u32 2147483647, %v2412
        %v2445 = vand.u32 2147483647, %v2413
        %v2446 = vand.u32 2147483647, %v2414
        %v2447 = vand.u32 2147483647, %v2415
        %v2448 = vand.u32 2147483647, %v2416
        %v2449 = vand.u32 2147483647, %v2417
        %v2450 = vand.u32 2147483647, %v2418
        %v2451 = vand.u32 2147483647, %v2419
        %v2452 = vand.u32 2147483647, %v2420
        %v2453 = vand.u32 2147483647, %v2421
        %v2454 = vand.u32 2147483647, %v2422
        %v2455 = vstv %s2097
        %v2456 = vsub.f32 %v2423, %v2455
        %v2457 = vsub.f32 %v2424, %v2455
        %v2458 = vsub.f32 %v2425, %v2455
        %v2459 = vsub.f32 %v2426, %v2455
        %v2460 = vsub.f32 %v2427, %v2455
        %v2461 = vsub.f32 %v2428, %v2455
        %v2462 = vsub.f32 %v2429, %v2455
        %v2463 = vsub.f32 %v2430, %v2455
        %v2464 = vsub.f32 %v2431, %v2455
        %v2465 = vsub.f32 %v2432, %v2455
        %v2466 = vsub.f32 %v2433, %v2455
        %v2467 = vsub.f32 %v2434, %v2455
        %v2468 = vsub.f32 %v2435, %v2455
        %v2469 = vsub.f32 %v2436, %v2455
        %v2470 = vsub.f32 %v2437, %v2455
        %v2471 = vsub.f32 %v2438, %v2455
        %v2472 = vsub.f32 %v2439, %v2455
        %v2473 = vsub.f32 %v2440, %v2455
        %v2474 = vsub.f32 %v2441, %v2455
        %v2475 = vsub.f32 %v2442, %v2455
        %v2476 = vsub.f32 %v2443, %v2455
        %v2477 = vsub.f32 %v2444, %v2455
        %v2478 = vsub.f32 %v2445, %v2455
        %v2479 = vsub.f32 %v2446, %v2455
        %v2480 = vsub.f32 %v2447, %v2455
        %v2481 = vsub.f32 %v2448, %v2455
        %v2482 = vsub.f32 %v2449, %v2455
        %v2483 = vsub.f32 %v2450, %v2455
        %v2484 = vsub.f32 %v2451, %v2455
        %v2485 = vsub.f32 %v2452, %v2455
        %v2486 = vsub.f32 %v2453, %v2455
        %v2487 = vsub.f32 %v2454, %v2455
        %v2488 = vmax.f32 %v2358, 0.0
        %v2489 = vmax.f32 %v2359, 0.0
        %v2490 = vmax.f32 %v2360, 0.0
        %v2491 = vmax.f32 %v2361, 0.0
        %v2492 = vmax.f32 %v2362, 0.0
        %v2493 = vmax.f32 %v2363, 0.0
        %v2494 = vmax.f32 %v2364, 0.0
        %v2495 = vmax.f32 %v2365, 0.0
        %v2496 = vmax.f32 %v2366, 0.0
        %v2497 = vmax.f32 %v2367, 0.0
        %v2498 = vmax.f32 %v2368, 0.0
        %v2499 = vmax.f32 %v2369, 0.0
        %v2500 = vmax.f32 %v2370, 0.0
        %v2501 = vmax.f32 %v2371, 0.0
        %v2502 = vmax.f32 %v2372, 0.0
        %v2503 = vmax.f32 %v2373, 0.0
        %v2504 = vmax.f32 %v2374, 0.0
        %v2505 = vmax.f32 %v2375, 0.0
        %v2506 = vmax.f32 %v2376, 0.0
        %v2507 = vmax.f32 %v2377, 0.0
        %v2508 = vmax.f32 %v2378, 0.0
        %v2509 = vmax.f32 %v2379, 0.0
        %v2510 = vmax.f32 %v2380, 0.0
        %v2511 = vmax.f32 %v2381, 0.0
        %v2512 = vmax.f32 %v2382, 0.0
        %v2513 = vmax.f32 %v2383, 0.0
        %v2514 = vmax.f32 %v2384, 0.0
        %v2515 = vmax.f32 %v2385, 0.0
        %v2516 = vmax.f32 %v2386, 0.0
        %v2517 = vmax.f32 %v2387, 0.0
        %v2518 = vmax.f32 %v2388, 0.0
        %v2519 = vmax.f32 %v2389, 0.0
        %v2520 = vmax.f32 %v2456, 0.0
        %v2521 = vmax.f32 %v2457, 0.0
        %v2522 = vmax.f32 %v2458, 0.0
        %v2523 = vmax.f32 %v2459, 0.0
        %v2524 = vmax.f32 %v2460, 0.0
        %v2525 = vmax.f32 %v2461, 0.0
        %v2526 = vmax.f32 %v2462, 0.0
        %v2527 = vmax.f32 %v2463, 0.0
        %v2528 = vmax.f32 %v2464, 0.0
        %v2529 = vmax.f32 %v2465, 0.0
        %v2530 = vmax.f32 %v2466, 0.0
        %v2531 = vmax.f32 %v2467, 0.0
        %v2532 = vmax.f32 %v2468, 0.0
        %v2533 = vmax.f32 %v2469, 0.0
        %v2534 = vmax.f32 %v2470, 0.0
        %v2535 = vmax.f32 %v2471, 0.0
        %v2536 = vmax.f32 %v2472, 0.0
        %v2537 = vmax.f32 %v2473, 0.0
        %v2538 = vmax.f32 %v2474, 0.0
        %v2539 = vmax.f32 %v2475, 0.0
        %v2540 = vmax.f32 %v2476, 0.0
        %v2541 = vmax.f32 %v2477, 0.0
        %v2542 = vmax.f32 %v2478, 0.0
        %v2543 = vmax.f32 %v2479, 0.0
        %v2544 = vmax.f32 %v2480, 0.0
        %v2545 = vmax.f32 %v2481, 0.0
        %v2546 = vmax.f32 %v2482, 0.0
        %v2547 = vmax.f32 %v2483, 0.0
        %v2548 = vmax.f32 %v2484, 0.0
        %v2549 = vmax.f32 %v2485, 0.0
        %v2550 = vmax.f32 %v2486, 0.0
        %v2551 = vmax.f32 %v2487, 0.0
        %v2552 = vmul.f32 %v2488, %v2488
        %v2553 = vmul.f32 %v2489, %v2489
        %v2554 = vmul.f32 %v2490, %v2490
        %v2555 = vmul.f32 %v2491, %v2491
        %v2556 = vmul.f32 %v2492, %v2492
        %v2557 = vmul.f32 %v2493, %v2493
        %v2558 = vmul.f32 %v2494, %v2494
        %v2559 = vmul.f32 %v2495, %v2495
        %v2560 = vmul.f32 %v2496, %v2496
        %v2561 = vmul.f32 %v2497, %v2497
        %v2562 = vmul.f32 %v2498, %v2498
        %v2563 = vmul.f32 %v2499, %v2499
        %v2564 = vmul.f32 %v2500, %v2500
        %v2565 = vmul.f32 %v2501, %v2501
        %v2566 = vmul.f32 %v2502, %v2502
        %v2567 = vmul.f32 %v2503, %v2503
        %v2568 = vmul.f32 %v2504, %v2504
        %v2569 = vmul.f32 %v2505, %v2505
        %v2570 = vmul.f32 %v2506, %v2506
        %v2571 = vmul.f32 %v2507, %v2507
        %v2572 = vmul.f32 %v2508, %v2508
        %v2573 = vmul.f32 %v2509, %v2509
        %v2574 = vmul.f32 %v2510, %v2510
        %v2575 = vmul.f32 %v2511, %v2511
        %v2576 = vmul.f32 %v2512, %v2512
        %v2577 = vmul.f32 %v2513, %v2513
        %v2578 = vmul.f32 %v2514, %v2514
        %v2579 = vmul.f32 %v2515, %v2515
        %v2580 = vmul.f32 %v2516, %v2516
        %v2581 = vmul.f32 %v2517, %v2517
        %v2582 = vmul.f32 %v2518, %v2518
        %v2583 = vmul.f32 %v2519, %v2519
        %v2584 = vmul.f32 %v2520, %v2520
        %v2585 = vmul.f32 %v2521, %v2521
        %v2586 = vmul.f32 %v2522, %v2522
        %v2587 = vmul.f32 %v2523, %v2523
        %v2588 = vmul.f32 %v2524, %v2524
        %v2589 = vmul.f32 %v2525, %v2525
        %v2590 = vmul.f32 %v2526, %v2526
        %v2591 = vmul.f32 %v2527, %v2527
        %v2592 = vmul.f32 %v2528, %v2528
        %v2593 = vmul.f32 %v2529, %v2529
        %v2594 = vmul.f32 %v2530, %v2530
        %v2595 = vmul.f32 %v2531, %v2531
        %v2596 = vmul.f32 %v2532, %v2532
        %v2597 = vmul.f32 %v2533, %v2533
        %v2598 = vmul.f32 %v2534, %v2534
        %v2599 = vmul.f32 %v2535, %v2535
        %v2600 = vmul.f32 %v2536, %v2536
        %v2601 = vmul.f32 %v2537, %v2537
        %v2602 = vmul.f32 %v2538, %v2538
        %v2603 = vmul.f32 %v2539, %v2539
        %v2604 = vmul.f32 %v2540, %v2540
        %v2605 = vmul.f32 %v2541, %v2541
        %v2606 = vmul.f32 %v2542, %v2542
        %v2607 = vmul.f32 %v2543, %v2543
        %v2608 = vmul.f32 %v2544, %v2544
        %v2609 = vmul.f32 %v2545, %v2545
        %v2610 = vmul.f32 %v2546, %v2546
        %v2611 = vmul.f32 %v2547, %v2547
        %v2612 = vmul.f32 %v2548, %v2548
        %v2613 = vmul.f32 %v2549, %v2549
        %v2614 = vmul.f32 %v2550, %v2550
        %v2615 = vmul.f32 %v2551, %v2551
        %v2616 = vadd.f32 %v2552, %v2584
        %v2617 = vadd.f32 %v2553, %v2585
        %v2618 = vadd.f32 %v2554, %v2586
        %v2619 = vadd.f32 %v2555, %v2587
        %v2620 = vadd.f32 %v2556, %v2588
        %v2621 = vadd.f32 %v2557, %v2589
        %v2622 = vadd.f32 %v2558, %v2590
        %v2623 = vadd.f32 %v2559, %v2591
        %v2624 = vadd.f32 %v2560, %v2592
        %v2625 = vadd.f32 %v2561, %v2593
        %v2626 = vadd.f32 %v2562, %v2594
        %v2627 = vadd.f32 %v2563, %v2595
        %v2628 = vadd.f32 %v2564, %v2596
        %v2629 = vadd.f32 %v2565, %v2597
        %v2630 = vadd.f32 %v2566, %v2598
        %v2631 = vadd.f32 %v2567, %v2599
        %v2632 = vadd.f32 %v2568, %v2600
        %v2633 = vadd.f32 %v2569, %v2601
        %v2634 = vadd.f32 %v2570, %v2602
        %v2635 = vadd.f32 %v2571, %v2603
        %v2636 = vadd.f32 %v2572, %v2604
        %v2637 = vadd.f32 %v2573, %v2605
        %v2638 = vadd.f32 %v2574, %v2606
        %v2639 = vadd.f32 %v2575, %v2607
        %v2640 = vadd.f32 %v2576, %v2608
        %v2641 = vadd.f32 %v2577, %v2609
        %v2642 = vadd.f32 %v2578, %v2610
        %v2643 = vadd.f32 %v2579, %v2611
        %v2644 = vadd.f32 %v2580, %v2612
        %v2645 = vadd.f32 %v2581, %v2613
        %v2646 = vadd.f32 %v2582, %v2614
        %v2647 = vadd.f32 %v2583, %v2615
        %v2648 = vrsqrt.pop %v2616
        %v2649 = vmul.f32 %v2616, %v2648
        %vm2650 = vcmp.eq.f32.partialorder %v2616, inf
        %v2651 = vsel %vm2650, %v2616, %v2649
        %vm2652 = vcmp.eq.f32.partialorder %v2616, 0.0
        %v2653 = vand.u32 %v2616, 2147483648
        %v2654 = vsel %vm2652, %v2653, %v2651
        %v2655 = vrsqrt.pop %v2617
        %v2656 = vmul.f32 %v2617, %v2655
        %vm2657 = vcmp.eq.f32.partialorder %v2617, inf
        %v2658 = vsel %vm2657, %v2617, %v2656
        %vm2659 = vcmp.eq.f32.partialorder %v2617, 0.0
        %v2660 = vand.u32 %v2617, 2147483648
        %v2661 = vsel %vm2659, %v2660, %v2658
        %v2662 = vrsqrt.pop %v2618
        %v2663 = vmul.f32 %v2618, %v2662
        %vm2664 = vcmp.eq.f32.partialorder %v2618, inf
        %v2665 = vsel %vm2664, %v2618, %v2663
        %vm2666 = vcmp.eq.f32.partialorder %v2618, 0.0
        %v2667 = vand.u32 %v2618, 2147483648
        %v2668 = vsel %vm2666, %v2667, %v2665
        %v2669 = vrsqrt.pop %v2619
        %v2670 = vmul.f32 %v2619, %v2669
        %vm2671 = vcmp.eq.f32.partialorder %v2619, inf
        %v2672 = vsel %vm2671, %v2619, %v2670
        %vm2673 = vcmp.eq.f32.partialorder %v2619, 0.0
        %v2674 = vand.u32 %v2619, 2147483648
        %v2675 = vsel %vm2673, %v2674, %v2672
        %v2676 = vrsqrt.pop %v2620
        %v2677 = vmul.f32 %v2620, %v2676
        %vm2678 = vcmp.eq.f32.partialorder %v2620, inf
        %v2679 = vsel %vm2678, %v2620, %v2677
        %vm2680 = vcmp.eq.f32.partialorder %v2620, 0.0
        %v2681 = vand.u32 %v2620, 2147483648
        %v2682 = vsel %vm2680, %v2681, %v2679
        %v2683 = vrsqrt.pop %v2621
        %v2684 = vmul.f32 %v2621, %v2683
        %vm2685 = vcmp.eq.f32.partialorder %v2621, inf
        %v2686 = vsel %vm2685, %v2621, %v2684
        %vm2687 = vcmp.eq.f32.partialorder %v2621, 0.0
        %v2688 = vand.u32 %v2621, 2147483648
        %v2689 = vsel %vm2687, %v2688, %v2686
        %v2690 = vrsqrt.pop %v2622
        %v2691 = vmul.f32 %v2622, %v2690
        %vm2692 = vcmp.eq.f32.partialorder %v2622, inf
        %v2693 = vsel %vm2692, %v2622, %v2691
        %vm2694 = vcmp.eq.f32.partialorder %v2622, 0.0
        %v2695 = vand.u32 %v2622, 2147483648
        %v2696 = vsel %vm2694, %v2695, %v2693
        %v2697 = vrsqrt.pop %v2623
        %v2698 = vmul.f32 %v2623, %v2697
        %vm2699 = vcmp.eq.f32.partialorder %v2623, inf
        %v2700 = vsel %vm2699, %v2623, %v2698
        %vm2701 = vcmp.eq.f32.partialorder %v2623, 0.0
        %v2702 = vand.u32 %v2623, 2147483648
        %v2703 = vsel %vm2701, %v2702, %v2700
        %v2704 = vrsqrt.pop %v2624
        %v2705 = vmul.f32 %v2624, %v2704
        %vm2706 = vcmp.eq.f32.partialorder %v2624, inf
        %v2707 = vsel %vm2706, %v2624, %v2705
        %vm2708 = vcmp.eq.f32.partialorder %v2624, 0.0
        %v2709 = vand.u32 %v2624, 2147483648
        %v2710 = vsel %vm2708, %v2709, %v2707
        %v2711 = vrsqrt.pop %v2625
        %v2712 = vmul.f32 %v2625, %v2711
        %vm2713 = vcmp.eq.f32.partialorder %v2625, inf
        %v2714 = vsel %vm2713, %v2625, %v2712
        %vm2715 = vcmp.eq.f32.partialorder %v2625, 0.0
        %v2716 = vand.u32 %v2625, 2147483648
        %v2717 = vsel %vm2715, %v2716, %v2714
        %v2718 = vrsqrt.pop %v2626
        %v2719 = vmul.f32 %v2626, %v2718
        %vm2720 = vcmp.eq.f32.partialorder %v2626, inf
        %v2721 = vsel %vm2720, %v2626, %v2719
        %vm2722 = vcmp.eq.f32.partialorder %v2626, 0.0
        %v2723 = vand.u32 %v2626, 2147483648
        %v2724 = vsel %vm2722, %v2723, %v2721
        %v2725 = vrsqrt.pop %v2627
        %v2726 = vmul.f32 %v2627, %v2725
        %vm2727 = vcmp.eq.f32.partialorder %v2627, inf
        %v2728 = vsel %vm2727, %v2627, %v2726
        %vm2729 = vcmp.eq.f32.partialorder %v2627, 0.0
        %v2730 = vand.u32 %v2627, 2147483648
        %v2731 = vsel %vm2729, %v2730, %v2728
        %v2732 = vrsqrt.pop %v2628
        %v2733 = vmul.f32 %v2628, %v2732
        %vm2734 = vcmp.eq.f32.partialorder %v2628, inf
        %v2735 = vsel %vm2734, %v2628, %v2733
        %vm2736 = vcmp.eq.f32.partialorder %v2628, 0.0
        %v2737 = vand.u32 %v2628, 2147483648
        %v2738 = vsel %vm2736, %v2737, %v2735
        %v2739 = vrsqrt.pop %v2629
        %v2740 = vmul.f32 %v2629, %v2739
        %vm2741 = vcmp.eq.f32.partialorder %v2629, inf
        %v2742 = vsel %vm2741, %v2629, %v2740
        %vm2743 = vcmp.eq.f32.partialorder %v2629, 0.0
        %v2744 = vand.u32 %v2629, 2147483648
        %v2745 = vsel %vm2743, %v2744, %v2742
        %v2746 = vrsqrt.pop %v2630
        %v2747 = vmul.f32 %v2630, %v2746
        %vm2748 = vcmp.eq.f32.partialorder %v2630, inf
        %v2749 = vsel %vm2748, %v2630, %v2747
        %vm2750 = vcmp.eq.f32.partialorder %v2630, 0.0
        %v2751 = vand.u32 %v2630, 2147483648
        %v2752 = vsel %vm2750, %v2751, %v2749
        %v2753 = vrsqrt.pop %v2631
        %v2754 = vmul.f32 %v2631, %v2753
        %vm2755 = vcmp.eq.f32.partialorder %v2631, inf
        %v2756 = vsel %vm2755, %v2631, %v2754
        %vm2757 = vcmp.eq.f32.partialorder %v2631, 0.0
        %v2758 = vand.u32 %v2631, 2147483648
        %v2759 = vsel %vm2757, %v2758, %v2756
        %v2760 = vrsqrt.pop %v2632
        %v2761 = vmul.f32 %v2632, %v2760
        %vm2762 = vcmp.eq.f32.partialorder %v2632, inf
        %v2763 = vsel %vm2762, %v2632, %v2761
        %vm2764 = vcmp.eq.f32.partialorder %v2632, 0.0
        %v2765 = vand.u32 %v2632, 2147483648
        %v2766 = vsel %vm2764, %v2765, %v2763
        %v2767 = vrsqrt.pop %v2633
        %v2768 = vmul.f32 %v2633, %v2767
        %vm2769 = vcmp.eq.f32.partialorder %v2633, inf
        %v2770 = vsel %vm2769, %v2633, %v2768
        %vm2771 = vcmp.eq.f32.partialorder %v2633, 0.0
        %v2772 = vand.u32 %v2633, 2147483648
        %v2773 = vsel %vm2771, %v2772, %v2770
        %v2774 = vrsqrt.pop %v2634
        %v2775 = vmul.f32 %v2634, %v2774
        %vm2776 = vcmp.eq.f32.partialorder %v2634, inf
        %v2777 = vsel %vm2776, %v2634, %v2775
        %vm2778 = vcmp.eq.f32.partialorder %v2634, 0.0
        %v2779 = vand.u32 %v2634, 2147483648
        %v2780 = vsel %vm2778, %v2779, %v2777
        %v2781 = vrsqrt.pop %v2635
        %v2782 = vmul.f32 %v2635, %v2781
        %vm2783 = vcmp.eq.f32.partialorder %v2635, inf
        %v2784 = vsel %vm2783, %v2635, %v2782
        %vm2785 = vcmp.eq.f32.partialorder %v2635, 0.0
        %v2786 = vand.u32 %v2635, 2147483648
        %v2787 = vsel %vm2785, %v2786, %v2784
        %v2788 = vrsqrt.pop %v2636
        %v2789 = vmul.f32 %v2636, %v2788
        %vm2790 = vcmp.eq.f32.partialorder %v2636, inf
        %v2791 = vsel %vm2790, %v2636, %v2789
        %vm2792 = vcmp.eq.f32.partialorder %v2636, 0.0
        %v2793 = vand.u32 %v2636, 2147483648
        %v2794 = vsel %vm2792, %v2793, %v2791
        %v2795 = vrsqrt.pop %v2637
        %v2796 = vmul.f32 %v2637, %v2795
        %vm2797 = vcmp.eq.f32.partialorder %v2637, inf
        %v2798 = vsel %vm2797, %v2637, %v2796
        %vm2799 = vcmp.eq.f32.partialorder %v2637, 0.0
        %v2800 = vand.u32 %v2637, 2147483648
        %v2801 = vsel %vm2799, %v2800, %v2798
        %v2802 = vrsqrt.pop %v2638
        %v2803 = vmul.f32 %v2638, %v2802
        %vm2804 = vcmp.eq.f32.partialorder %v2638, inf
        %v2805 = vsel %vm2804, %v2638, %v2803
        %vm2806 = vcmp.eq.f32.partialorder %v2638, 0.0
        %v2807 = vand.u32 %v2638, 2147483648
        %v2808 = vsel %vm2806, %v2807, %v2805
        %v2809 = vrsqrt.pop %v2639
        %v2810 = vmul.f32 %v2639, %v2809
        %vm2811 = vcmp.eq.f32.partialorder %v2639, inf
        %v2812 = vsel %vm2811, %v2639, %v2810
        %vm2813 = vcmp.eq.f32.partialorder %v2639, 0.0
        %v2814 = vand.u32 %v2639, 2147483648
        %v2815 = vsel %vm2813, %v2814, %v2812
        %v2816 = vrsqrt.pop %v2640
        %v2817 = vmul.f32 %v2640, %v2816
        %vm2818 = vcmp.eq.f32.partialorder %v2640, inf
        %v2819 = vsel %vm2818, %v2640, %v2817
        %vm2820 = vcmp.eq.f32.partialorder %v2640, 0.0
        %v2821 = vand.u32 %v2640, 2147483648
        %v2822 = vsel %vm2820, %v2821, %v2819
        %v2823 = vrsqrt.pop %v2641
        %v2824 = vmul.f32 %v2641, %v2823
        %vm2825 = vcmp.eq.f32.partialorder %v2641, inf
        %v2826 = vsel %vm2825, %v2641, %v2824
        %vm2827 = vcmp.eq.f32.partialorder %v2641, 0.0
        %v2828 = vand.u32 %v2641, 2147483648
        %v2829 = vsel %vm2827, %v2828, %v2826
        %v2830 = vrsqrt.pop %v2642
        %v2831 = vmul.f32 %v2642, %v2830
        %vm2832 = vcmp.eq.f32.partialorder %v2642, inf
        %v2833 = vsel %vm2832, %v2642, %v2831
        %vm2834 = vcmp.eq.f32.partialorder %v2642, 0.0
        %v2835 = vand.u32 %v2642, 2147483648
        %v2836 = vsel %vm2834, %v2835, %v2833
        %v2837 = vrsqrt.pop %v2643
        %v2838 = vmul.f32 %v2643, %v2837
        %vm2839 = vcmp.eq.f32.partialorder %v2643, inf
        %v2840 = vsel %vm2839, %v2643, %v2838
        %vm2841 = vcmp.eq.f32.partialorder %v2643, 0.0
        %v2842 = vand.u32 %v2643, 2147483648
        %v2843 = vsel %vm2841, %v2842, %v2840
        %v2844 = vrsqrt.pop %v2644
        %v2845 = vmul.f32 %v2644, %v2844
        %vm2846 = vcmp.eq.f32.partialorder %v2644, inf
        %v2847 = vsel %vm2846, %v2644, %v2845
        %vm2848 = vcmp.eq.f32.partialorder %v2644, 0.0
        %v2849 = vand.u32 %v2644, 2147483648
        %v2850 = vsel %vm2848, %v2849, %v2847
        %v2851 = vrsqrt.pop %v2645
        %v2852 = vmul.f32 %v2645, %v2851
        %vm2853 = vcmp.eq.f32.partialorder %v2645, inf
        %v2854 = vsel %vm2853, %v2645, %v2852
        %vm2855 = vcmp.eq.f32.partialorder %v2645, 0.0
        %v2856 = vand.u32 %v2645, 2147483648
        %v2857 = vsel %vm2855, %v2856, %v2854
        %v2858 = vrsqrt.pop %v2646
        %v2859 = vmul.f32 %v2646, %v2858
        %vm2860 = vcmp.eq.f32.partialorder %v2646, inf
        %v2861 = vsel %vm2860, %v2646, %v2859
        %vm2862 = vcmp.eq.f32.partialorder %v2646, 0.0
        %v2863 = vand.u32 %v2646, 2147483648
        %v2864 = vsel %vm2862, %v2863, %v2861
        %v2865 = vrsqrt.pop %v2647
        %v2866 = vmul.f32 %v2647, %v2865
        %vm2867 = vcmp.eq.f32.partialorder %v2647, inf
        %v2868 = vsel %vm2867, %v2647, %v2866
        %vm2869 = vcmp.eq.f32.partialorder %v2647, 0.0
        %v2870 = vand.u32 %v2647, 2147483648
        %v2871 = vsel %vm2869, %v2870, %v2868
        %v2872 = vmax.f32 %v2358, %v2456
        %v2873 = vmax.f32 %v2359, %v2457
        %v2874 = vmax.f32 %v2360, %v2458
        %v2875 = vmax.f32 %v2361, %v2459
        %v2876 = vmax.f32 %v2362, %v2460
        %v2877 = vmax.f32 %v2363, %v2461
        %v2878 = vmax.f32 %v2364, %v2462
        %v2879 = vmax.f32 %v2365, %v2463
        %v2880 = vmax.f32 %v2366, %v2464
        %v2881 = vmax.f32 %v2367, %v2465
        %v2882 = vmax.f32 %v2368, %v2466
        %v2883 = vmax.f32 %v2369, %v2467
        %v2884 = vmax.f32 %v2370, %v2468
        %v2885 = vmax.f32 %v2371, %v2469
        %v2886 = vmax.f32 %v2372, %v2470
        %v2887 = vmax.f32 %v2373, %v2471
        %v2888 = vmax.f32 %v2374, %v2472
        %v2889 = vmax.f32 %v2375, %v2473
        %v2890 = vmax.f32 %v2376, %v2474
        %v2891 = vmax.f32 %v2377, %v2475
        %v2892 = vmax.f32 %v2378, %v2476
        %v2893 = vmax.f32 %v2379, %v2477
        %v2894 = vmax.f32 %v2380, %v2478
        %v2895 = vmax.f32 %v2381, %v2479
        %v2896 = vmax.f32 %v2382, %v2480
        %v2897 = vmax.f32 %v2383, %v2481
        %v2898 = vmax.f32 %v2384, %v2482
        %v2899 = vmax.f32 %v2385, %v2483
        %v2900 = vmax.f32 %v2386, %v2484
        %v2901 = vmax.f32 %v2387, %v2485
        %v2902 = vmax.f32 %v2388, %v2486
        %v2903 = vmax.f32 %v2389, %v2487
        %v2904 = vmin.f32 %v2872, 0.0
        %v2905 = vmin.f32 %v2873, 0.0
        %v2906 = vmin.f32 %v2874, 0.0
        %v2907 = vmin.f32 %v2875, 0.0
        %v2908 = vmin.f32 %v2876, 0.0
        %v2909 = vmin.f32 %v2877, 0.0
        %v2910 = vmin.f32 %v2878, 0.0
        %v2911 = vmin.f32 %v2879, 0.0
        %v2912 = vmin.f32 %v2880, 0.0
        %v2913 = vmin.f32 %v2881, 0.0
        %v2914 = vmin.f32 %v2882, 0.0
        %v2915 = vmin.f32 %v2883, 0.0
        %v2916 = vmin.f32 %v2884, 0.0
        %v2917 = vmin.f32 %v2885, 0.0
        %v2918 = vmin.f32 %v2886, 0.0
        %v2919 = vmin.f32 %v2887, 0.0
        %v2920 = vmin.f32 %v2888, 0.0
        %v2921 = vmin.f32 %v2889, 0.0
        %v2922 = vmin.f32 %v2890, 0.0
        %v2923 = vmin.f32 %v2891, 0.0
        %v2924 = vmin.f32 %v2892, 0.0
        %v2925 = vmin.f32 %v2893, 0.0
        %v2926 = vmin.f32 %v2894, 0.0
        %v2927 = vmin.f32 %v2895, 0.0
        %v2928 = vmin.f32 %v2896, 0.0
        %v2929 = vmin.f32 %v2897, 0.0
        %v2930 = vmin.f32 %v2898, 0.0
        %v2931 = vmin.f32 %v2899, 0.0
        %v2932 = vmin.f32 %v2900, 0.0
        %v2933 = vmin.f32 %v2901, 0.0
        %v2934 = vmin.f32 %v2902, 0.0
        %v2935 = vmin.f32 %v2903, 0.0
        %v2936 = vadd.f32 %v2654, %v2904
        %v2937 = vadd.f32 %v2661, %v2905
        %v2938 = vadd.f32 %v2668, %v2906
        %v2939 = vadd.f32 %v2675, %v2907
        %v2940 = vadd.f32 %v2682, %v2908
        %v2941 = vadd.f32 %v2689, %v2909
        %v2942 = vadd.f32 %v2696, %v2910
        %v2943 = vadd.f32 %v2703, %v2911
        %v2944 = vadd.f32 %v2710, %v2912
        %v2945 = vadd.f32 %v2717, %v2913
        %v2946 = vadd.f32 %v2724, %v2914
        %v2947 = vadd.f32 %v2731, %v2915
        %v2948 = vadd.f32 %v2738, %v2916
        %v2949 = vadd.f32 %v2745, %v2917
        %v2950 = vadd.f32 %v2752, %v2918
        %v2951 = vadd.f32 %v2759, %v2919
        %v2952 = vadd.f32 %v2766, %v2920
        %v2953 = vadd.f32 %v2773, %v2921
        %v2954 = vadd.f32 %v2780, %v2922
        %v2955 = vadd.f32 %v2787, %v2923
        %v2956 = vadd.f32 %v2794, %v2924
        %v2957 = vadd.f32 %v2801, %v2925
        %v2958 = vadd.f32 %v2808, %v2926
        %v2959 = vadd.f32 %v2815, %v2927
        %v2960 = vadd.f32 %v2822, %v2928
        %v2961 = vadd.f32 %v2829, %v2929
        %v2962 = vadd.f32 %v2836, %v2930
        %v2963 = vadd.f32 %v2843, %v2931
        %v2964 = vadd.f32 %v2850, %v2932
        %v2965 = vadd.f32 %v2857, %v2933
        %v2966 = vadd.f32 %v2864, %v2934
        %v2967 = vadd.f32 %v2871, %v2935
        %v2968 = vmin.f32 %v2060, %v2936
        %v2969 = vmin.f32 %v2061, %v2937
        %v2970 = vmin.f32 %v2062, %v2938
        %v2971 = vmin.f32 %v2063, %v2939
        %v2972 = vmin.f32 %v2064, %v2940
        %v2973 = vmin.f32 %v2065, %v2941
        %v2974 = vmin.f32 %v2066, %v2942
        %v2975 = vmin.f32 %v2067, %v2943
        %v2976 = vmin.f32 %v2068, %v2944
        %v2977 = vmin.f32 %v2069, %v2945
        %v2978 = vmin.f32 %v2070, %v2946
        %v2979 = vmin.f32 %v2071, %v2947
        %v2980 = vmin.f32 %v2072, %v2948
        %v2981 = vmin.f32 %v2073, %v2949
        %v2982 = vmin.f32 %v2074, %v2950
        %v2983 = vmin.f32 %v2075, %v2951
        %v2984 = vmin.f32 %v2076, %v2952
        %v2985 = vmin.f32 %v2077, %v2953
        %v2986 = vmin.f32 %v2078, %v2954
        %v2987 = vmin.f32 %v2079, %v2955
        %v2988 = vmin.f32 %v2080, %v2956
        %v2989 = vmin.f32 %v2081, %v2957
        %v2990 = vmin.f32 %v2082, %v2958
        %v2991 = vmin.f32 %v2083, %v2959
        %v2992 = vmin.f32 %v2084, %v2960
        %v2993 = vmin.f32 %v2085, %v2961
        %v2994 = vmin.f32 %v2086, %v2962
        %v2995 = vmin.f32 %v2087, %v2963
        %v2996 = vmin.f32 %v2088, %v2964
        %v2997 = vmin.f32 %v2089, %v2965
        %v2998 = vmin.f32 %v2090, %v2966
        %v2999 = vmin.f32 %v2091, %v2967
        %3000 = vst [vmem:[%s240] sm:$0xff] %v2968
        %3001 = vst [vmem:[%s240 + $0x8] sm:$0xff] %v2969
        %3002 = vst [vmem:[%s240 + $0x10] sm:$0xff] %v2970
        %3003 = vst [vmem:[%s240 + $0x18] sm:$0xff] %v2971
        %3004 = vst [vmem:[%s240 + $0x20] sm:$0xff] %v2972
        %3005 = vst [vmem:[%s240 + $0x28] sm:$0xff] %v2973
        %3006 = vst [vmem:[%s240 + $0x30] sm:$0xff] %v2974
        %3007 = vst [vmem:[%s240 + $0x38] sm:$0xff] %v2975
        %3008 = vst [vmem:[%s240 + $0x40] sm:$0xff] %v2976
        %3009 = vst [vmem:[%s240 + $0x48] sm:$0xff] %v2977
        %3010 = vst [vmem:[%s240 + $0x50] sm:$0xff] %v2978
        %3011 = vst [vmem:[%s240 + $0x58] sm:$0xff] %v2979
        %3012 = vst [vmem:[%s240 + $0x60] sm:$0xff] %v2980
        %3013 = vst [vmem:[%s240 + $0x68] sm:$0xff] %v2981
        %3014 = vst [vmem:[%s240 + $0x70] sm:$0xff] %v2982
        %3015 = vst [vmem:[%s240 + $0x78] sm:$0xff] %v2983
        %3016 = vst [vmem:[%s240 + $0x80] sm:$0xff] %v2984
        %3017 = vst [vmem:[%s240 + $0x88] sm:$0xff] %v2985
        %3018 = vst [vmem:[%s240 + $0x90] sm:$0xff] %v2986
        %3019 = vst [vmem:[%s240 + $0x98] sm:$0xff] %v2987
        %3020 = vst [vmem:[%s240 + $0xa0] sm:$0xff] %v2988
        %3021 = vst [vmem:[%s240 + $0xa8] sm:$0xff] %v2989
        %3022 = vst [vmem:[%s240 + $0xb0] sm:$0xff] %v2990
        %3023 = vst [vmem:[%s240 + $0xb8] sm:$0xff] %v2991
        %3024 = vst [vmem:[%s240 + $0xc0] sm:$0xff] %v2992
        %3025 = vst [vmem:[%s240 + $0xc8] sm:$0xff] %v2993
        %3026 = vst [vmem:[%s240 + $0xd0] sm:$0xff] %v2994
        %3027 = vst [vmem:[%s240 + $0xd8] sm:$0xff] %v2995
        %3028 = vst [vmem:[%s240 + $0xe0] sm:$0xff] %v2996
        %3029 = vst [vmem:[%s240 + $0xe8] sm:$0xff] %v2997
        %3030 = vst [vmem:[%s240 + $0xf0] sm:$0xff] %v2998
        %3031 = vst [vmem:[%s240 + $0xf8] sm:$0xff] %v2999
        %s3032 = sand.u32 %s105, 1
        %s3033 = scalar_lea.sflag [#allocation4], %s3032
        %s3034 = sand.u32 %s105, 1
        %s3035 = smul.addr %s3034, 256
        %s3036 = scalar_lea.vmem [#allocation9], %s3035
        // Predicated region
        $region45: #{tpu_custom_call.1} parent=31 // pred_check
          %p3037 = pneg %p115
        $region46: #{tpu_custom_call.1} parent=31 // pred_check_branch
          %3039 = sbr.rel (%p3037) target = $region48
        $region47: #{tpu_custom_call.1} parent=31 // pred_region
          %s3040 = smul.u32 32, %s24
          %s3042 = ssub.s32 4096, 4096
          %3043 = vsyncadd %s3033, %s3042
          %s3044 = smul.addr %s3040, 128
          %s3045 = scalar_lea.hbm %s3, %s3044
          %s3046 = sshll.u32 %s3036, 4
          %s3047 = int_to_ptr.vmem [resolvable:$true] %s3046
          %3052 = dma.vmem_to_hbm [thread:$0]  %s3047, 4096, %s3045, %s3033, 128, 128, 8
        $region48: #{tpu_custom_call.1} parent=31 // pred_fallthru
          _
      $region32: #{tpu_custom_call.1} parent=5 // pred_fallthru
        _
      %p3053 = scmp.le.s32.totalorder 2, %s19
      // Predicated region
      $region49: #{tpu_custom_call.1} parent=5 // pred_check
        %p3054 = pneg %p3053
      $region50: #{tpu_custom_call.1} parent=5 // pred_check_branch
        %3056 = sbr.rel (%p3054) target = $region52
      $region51: #{tpu_custom_call.1} parent=5 // pred_region
        %s3057 = ssub.s32 %s19, 2
        // Predicated region
        $region53: #{tpu_custom_call.1} parent=51 // pred_check
          %p3058 = pneg %p121
        $region54: #{tpu_custom_call.1} parent=51 // pred_check_branch
          %3060 = sbr.rel (%p3058) target = $region56
        $region55: #{tpu_custom_call.1} parent=51 // pred_region
          %s3061 = sand.u32 %s106, 1
          %s3062 = scalar_lea.sflag [#allocation4], %s3061
          %s3063 = sand.u32 %s106, 1
          %s3064 = smul.addr %s3063, 256
          %s3065 = scalar_lea.vmem [#allocation9], %s3064
          %3066 = dma.done %s3062, 4096
        $region56: #{tpu_custom_call.1} parent=51 // pred_fallthru
          _
      $region52: #{tpu_custom_call.1} parent=5 // pred_fallthru
        _
    $region6: #{tpu_custom_call.1} parent=1 // loop_footer
      %s23 = sadd.s32 1, %s19
    $region7: #{tpu_custom_call.1} parent=1 // loop_footer_branch
      %18 = sbr.rel target = $region3
    $region8: #{tpu_custom_call.1} parent=1 // loop_exit
      _
    %3067 = vsyncpa [#allocation3], 1
    %s3068 = scalar_lea.sflag [#allocation3], 1
    %3069 = vsyncpa %s3068, 1
    %3070 = vsyncpa [#allocation8], 1
    %s3071 = scalar_lea.sflag [#allocation8], 1
    %3072 = vsyncpa %s3071, 1
    %3073 = vsyncpa [#allocation4], 1
    %s3074 = scalar_lea.sflag [#allocation4], 1
    %3075 = vsyncpa %s3074, 1
    %3076 = vsyncpa [#allocation5], 1
    %s3077 = scalar_lea.sflag [#allocation5], 1
    %3078 = vsyncpa %s3077, 1

</llo_original>
